<compile_context>
chip_gen: v7x
topology: tpu7x:2x2x1
jax: 0.10.0
libtpu: 0.0.40
codegen_flags: <defaults>
</compile_context>

<pallas_src>
import numpy as np
import jax
import jax.numpy as jnp
from jax import lax
from jax.experimental import pallas as pl
from jax.experimental.pallas import tpu as pltpu

# ---- model hyper-parameters (consistent with Net(adj, device, k, g)) ----
N_SIDE = 8
N      = N_SIDE * N_SIDE   # n1 = adj.shape[0] = 64 nodes (8x8 grid graph)
F_IN   = 1                 # f1 = 1
G_OUT  = 8                 # g
K_CHEB = 3                 # k
D_CLS  = 10                # d = 10

# ---- TPU layout constants ----
NP = 128                   # node count padded to lane width
DP = 128                   # class count padded to lane width
TB = 128                   # batch rows per grid step (one MXU-filling tile)
B  = 256                   # demo batch (2 tiles -> both v7x TensorCores busy)


# ----------------------------- fused Pallas kernel ---------------------------------

def fused_net_kernel(x_ref, t_ref, cheb_ref, wfc_ref, bfc_ref, o_ref):
    """ChebConv(1->G, K) + ReLU + Linear(N*G -> D) + log_softmax for TB samples at once.

    x_ref   : (TB, NP)          zero-padded per-node scalar features, one sample per row
    t_ref   : (NP, K*NP)        [T_0 | T_1 | ... | T_{K-1}](L_hat), zero-padded
    cheb_ref: (K+1, G*NP)       rows 0..K-1 = broadcast Cheb weights, row K = bias row
    wfc_ref : (G*NP, DP)        fc1 weight, channel-major rows, class lanes zero-padded
    bfc_ref : (1, DP)           fc1 bias, class lanes zero-padded
    o_ref   : (TB, DP)          log-probs (lanes >= D_CLS are padding)
    """
    # Chebyshev propagation for ALL orders in one lane-dense MXU matmul (no serialized chain).
    tx = jnp.dot(x_ref[...], t_ref[...], preferred_element_type=jnp.float32)   # (TB, K*NP)

    w = cheb_ref[...]                                                           # (K+1, G*NP)

    # Channel combine on the lane-dense slab: acc[b, g*NP + n] = sum_k tx[b, k*NP + n] * w[k, g].
    # 128-aligned lane slices + 128-aligned lane concat -> pure vreg placement, no cross-lane ops.
    acc = None
    for k in range(K_CHEB):
        blk  = tx[:, k * NP:(k + 1) * NP]                      # (TB, NP)
        term = jnp.concatenate([blk] * G_OUT, axis=1) * w[k:k + 1, :]   # (TB, G*NP)
        acc  = term if acc is None else acc + term

    h = jnp.maximum(acc + w[K_CHEB:K_CHEB + 1, :], 0.0)        # ChebConv bias + ReLU, (TB, G*NP)

    # fc1: plain (M,K)@(K,N) with a lane-dense RHS -> unmasked (TB, DP) result.
    logits = jnp.dot(h, wfc_ref[...], preferred_element_type=jnp.float32) + bfc_ref[...]

    # log_softmax over the D_CLS real classes; padded lanes excluded from the normalizer.
    lane   = lax.broadcasted_iota(jnp.int32, logits.shape, 1)
    logits = jnp.where(lane < D_CLS, logits, -jnp.inf)
    m      = jnp.max(logits, axis=-1, keepdims=True)
    lse    = m + jnp.log(jnp.sum(jnp.exp(logits - m), axis=-1, keepdims=True))
    o_ref[...] = logits - lse


# ------------------------------- wrapper --------------------------------------

@jax.jit
def net_forward(x_pad, t_stack, cheb, fc_w, fc_b_row):
    b = x_pad.shape[0]
    assert b % TB == 0, "batch must be a multiple of the TB tile"
    out = pl.pallas_call(
        fused_net_kernel,
        out_shape=jax.ShapeDtypeStruct((b, DP), jnp.float32),
        grid=(b // TB,),
        in_specs=[
            pl.BlockSpec((TB, NP),               lambda i: (i, 0)),   # per-tile samples
            pl.BlockSpec((NP, K_CHEB * NP),      lambda i: (0, 0)),   # T-stack (resident)
            pl.BlockSpec((K_CHEB + 1, G_OUT*NP), lambda i: (0, 0)),   # Cheb W+b   (resident)
            pl.BlockSpec((G_OUT * NP, DP),       lambda i: (0, 0)),   # fc1 weight (resident)
            pl.BlockSpec((1, DP),                lambda i: (0, 0)),   # fc1 bias   (resident)
        ],
        out_specs=pl.BlockSpec((TB, DP), lambda i: (i, 0)),
        compiler_params=pltpu.CompilerParams(dimension_semantics=("parallel",)),
    )(x_pad, t_stack, cheb, fc_w, fc_b_row)
    return out[:, :D_CLS]                         # drop padded class lanes


# ------------------------ host-side, one-time layout prep -----------------------

def prepare_params(l_hat, w_cheb, b_cheb, fc_w, fc_b):
    """Graph-structure precompute + parameter re-layout (no cross-layer weight folding)."""
    L = np.asarray(l_hat, np.float32)
    assert np.allclose(L, L.T, atol=1e-6), "kernel's row-vector form requires symmetric L_hat"

    # Chebyshev basis T_k(L_hat) on the static graph, zero-padded to NP lanes.
    Ts = [np.eye(N, dtype=np.float32)]
    if K_CHEB > 1:
        Ts.append(L.copy())
    for _ in range(2, K_CHEB):
        Ts.append(2.0 * (L @ Ts[-1]) - Ts[-2])
    t_stack = np.zeros((NP, K_CHEB * NP), np.float32)
    for k, T in enumerate(Ts):
        t_stack[:N, k * NP:k * NP + N] = T

    # ChebConv weights broadcast to channel-major rows + bias row, packed into one array.
    wc = np.asarray(w_cheb, np.float32)            # (K, 1, G)
    bc = np.asarray(b_cheb, np.float32)            # (G,)
    cheb = np.zeros((K_CHEB + 1, G_OUT * NP), np.float32)
    for g in range(G_OUT):
        cheb[:K_CHEB, g * NP:g * NP + N] = wc[:, 0, g][:, None]
        cheb[K_CHEB,  g * NP:g * NP + N] = bc[g]

    # torch fc1.weight is (D, N*G) with input index n*G+g (x.view(-1) order);
    # re-layout to channel-major rows (g*NP + n) and pad nodes/classes with zeros.
    fw = np.asarray(fc_w, np.float32).reshape(D_CLS, N, G_OUT)   # [d, n, g]
    fc_w_pad = np.zeros((G_OUT, NP, DP), np.float32)
    fc_w_pad[:, :N, :D_CLS] = fw.transpose(2, 1, 0)              # [g, n, d]
    fc_w_kernel = fc_w_pad.reshape(G_OUT * NP, DP)

    fc_b_row = np.zeros((1, DP), np.float32)
    fc_b_row[0, :D_CLS] = np.asarray(fc_b, np.float32)

    return (jnp.asarray(t_stack), jnp.asarray(cheb),
            jnp.asarray(fc_w_kernel), jnp.asarray(fc_b_row))


def prepare_batch(x_batch):
    """(B, N, 1) node features -> zero-padded lane-dense (B, NP)."""
    xb = np.asarray(x_batch, np.float32).reshape(-1, N)
    out = np.zeros((xb.shape[0], NP), np.float32)
    out[:, :N] = xb
    return jnp.asarray(out)


# ------------------------ graph / parameter construction -----------------------

def build_grid_adjacency(n_side):
    n = n_side * n_side
    A = np.zeros((n, n), np.float32)
    for r in range(n_side):
        for c in range(n_side):
            i = r * n_side + c
            for dr, dc in ((0, 1), (1, 0), (0, -1), (-1, 0)):
                rr, cc = r + dr, c + dc
                if 0 <= rr < n_side and 0 <= cc < n_side:
                    A[i, rr * n_side + cc] = 1.0
    return A


def scaled_laplacian(A, lambda_max=2.0):
    # PyG ChebConv norm: L_sym = I - D^{-1/2} A D^{-1/2}; L_hat = 2*L_sym/lambda_max - I (symmetric)
    deg = A.sum(axis=1)
    dinv = np.where(deg > 0.0, 1.0 / np.sqrt(deg), 0.0).astype(np.float32)
    L = np.eye(A.shape[0], dtype=np.float32) - (dinv[:, None] * A * dinv[None, :])
    return ((2.0 / lambda_max) * L - np.eye(A.shape[0], dtype=np.float32)).astype(np.float32)


def reference(x_batch, L, wc, bc, fw, fb):
    """Pure-JAX per-sample reference mirroring the torch module."""
    def one(xv):
        x = xv.reshape(N, F_IN)
        tx0 = x
        out = tx0 @ wc[0]
        tx1 = L @ tx0
        out = out + tx1 @ wc[1]
        for k in range(2, K_CHEB):
            tx2 = 2.0 * (L @ tx1) - tx0
            out = out + tx2 @ wc[k]
            tx0, tx1 = tx1, tx2
        h = jnp.maximum(out + bc.reshape(1, -1), 0.0)
        logits = h.reshape(-1) @ fw.T + fb          # torch Linear: x @ W^T + b
        return jax.nn.log_softmax(logits, axis=0)
    return jax.vmap(one)(x_batch.reshape(-1, N))


# ------------------------------------ main --------------------------------------

if __name__ == "__main__":
    key = jax.random.PRNGKey(0)
    k_x, k_w, k_b, k_fw, k_fb = jax.random.split(key, 5)

    # graph structure (stand-in for the MNIST superpixel adjacency)
    # TODO(synk): sparse edge_index -> dense L_hat construction stays host-side (static graph).
    A = build_grid_adjacency(N_SIDE)
    l_hat = jnp.asarray(scaled_laplacian(A))                          # (N, N), symmetric

    # deterministic synthetic parameters (shapes from Net.__init__); nonzero ChebConv bias
    w_cheb = (jax.random.normal(k_w, (K_CHEB, F_IN, G_OUT), jnp.float32)
              * (1.0 / np.sqrt(F_IN * K_CHEB)))                       # ChebConv weights
    b_cheb = jax.random.normal(k_b, (G_OUT,), jnp.float32) * 0.1      # ChebConv bias (nonzero!)
    fc_w = (jax.random.normal(k_fw, (D_CLS, N * G_OUT), jnp.float32)
            * (1.0 / np.sqrt(N * G_OUT)))                             # fc1.weight (out, in)
    fc_b = jax.random.normal(k_fb, (D_CLS,), jnp.float32) * 0.01      # fc1.bias

    # batch of inputs: one scalar feature per node per sample
    x = jax.random.uniform(k_x, (B, N, F_IN), jnp.float32)

    # one-time layout prep (outside the jitted hot path)
    t_stack, cheb, fc_w_k, fc_b_row = prepare_params(l_hat, w_cheb, b_cheb, fc_w, fc_b)
    x_pad = prepare_batch(x)

    out = net_forward(x_pad, t_stack, cheb, fc_w_k, fc_b_row)
    out = jax.block_until_ready(out)

    ref = reference(x, l_hat, w_cheb, b_cheb, fc_w, fc_b)
    assert out.shape == (B, D_CLS)
    assert np.allclose(np.asarray(out), np.asarray(ref), atol=2e-4, rtol=2e-4), (
        np.max(np.abs(np.asarray(out) - np.asarray(ref))))

    print("KERNEL_OK")
</pallas_src>

<mosaic_0001>
module attributes {stable_mosaic.version = 11 : i64} {
  func.func @fused_net_kernel(%arg0: i32, %arg1: memref<128x128xf32, #tpu.memory_space<vmem>>, %arg2: memref<128x384xf32, #tpu.memory_space<vmem>>, %arg3: memref<4x1024xf32, #tpu.memory_space<vmem>>, %arg4: memref<1024x128xf32, #tpu.memory_space<vmem>>, %arg5: memref<1x128xf32, #tpu.memory_space<vmem>>, %arg6: memref<128x128xf32, #tpu.memory_space<vmem>>) attributes {dimension_semantics = [#tpu.dimension_semantics<parallel>], iteration_bounds = array<i64: 2>, scalar_prefetch = 0 : i64, scratch_operands = 0 : i64, tpu.core_type = #tpu.core_type<tc>, window_params = [{transform_indices = @transform_0, window_bounds = array<i64: 128, 128>}, {pipeline_mode = #tpu.pipeline_mode<synchronous>, transform_indices = @transform_1, window_bounds = array<i64: 128, 384>}, {pipeline_mode = #tpu.pipeline_mode<synchronous>, transform_indices = @transform_2, window_bounds = array<i64: 4, 1024>}, {pipeline_mode = #tpu.pipeline_mode<synchronous>, transform_indices = @transform_3, window_bounds = array<i64: 1024, 128>}, {pipeline_mode = #tpu.pipeline_mode<synchronous>, transform_indices = @transform_4, window_bounds = array<i64: 1, 128>}, {transform_indices = @transform_5, window_bounds = array<i64: 128, 128>}]} {
    %c0 = arith.constant 0 : index
    %c0_0 = arith.constant 0 : index
    %0 = vector.load %arg1[%c0, %c0_0] : memref<128x128xf32, #tpu.memory_space<vmem>>, vector<128x128xf32>
    %c0_1 = arith.constant 0 : index
    %c0_2 = arith.constant 0 : index
    %1 = vector.load %arg2[%c0_1, %c0_2] : memref<128x384xf32, #tpu.memory_space<vmem>>, vector<128x384xf32>
    %cst = arith.constant dense<0.000000e+00> : vector<128x384xf32>
    %2 = tpu.matmul %0, %1, %cst {dimension_numbers = #tpu.dot_dimension_numbers<[1], [0], [0], [1], [0, 0, 1, 1], [], []>} : vector<128x128xf32>, vector<128x384xf32>, vector<128x384xf32> -> vector<128x384xf32>
    %c0_3 = arith.constant 0 : index
    %c0_4 = arith.constant 0 : index
    %3 = vector.load %arg3[%c0_3, %c0_4] : memref<4x1024xf32, #tpu.memory_space<vmem>>, vector<4x1024xf32>
    %4 = vector.extract_strided_slice %2 {offsets = [0, 0], sizes = [128, 128], strides = [1, 1]} : vector<128x384xf32> to vector<128x128xf32>
    %5 = tpu.concatenate %4, %4, %4, %4, %4, %4, %4, %4 in 1 : vector<128x128xf32>, vector<128x128xf32>, vector<128x128xf32>, vector<128x128xf32>, vector<128x128xf32>, vector<128x128xf32>, vector<128x128xf32>, vector<128x128xf32> -> vector<128x1024xf32>
    %6 = vector.extract_strided_slice %3 {offsets = [0, 0], sizes = [1, 1024], strides = [1, 1]} : vector<4x1024xf32> to vector<1x1024xf32>
    %7 = vector.broadcast %6 : vector<1x1024xf32> to vector<128x1024xf32>
    %8 = arith.mulf %5, %7 : vector<128x1024xf32>
    %9 = vector.extract_strided_slice %2 {offsets = [0, 128], sizes = [128, 128], strides = [1, 1]} : vector<128x384xf32> to vector<128x128xf32>
    %10 = tpu.concatenate %9, %9, %9, %9, %9, %9, %9, %9 in 1 : vector<128x128xf32>, vector<128x128xf32>, vector<128x128xf32>, vector<128x128xf32>, vector<128x128xf32>, vector<128x128xf32>, vector<128x128xf32>, vector<128x128xf32> -> vector<128x1024xf32>
    %11 = vector.extract_strided_slice %3 {offsets = [1, 0], sizes = [1, 1024], strides = [1, 1]} : vector<4x1024xf32> to vector<1x1024xf32>
    %12 = vector.broadcast %11 : vector<1x1024xf32> to vector<128x1024xf32>
    %13 = arith.mulf %10, %12 : vector<128x1024xf32>
    %14 = arith.addf %8, %13 : vector<128x1024xf32>
    %15 = vector.extract_strided_slice %2 {offsets = [0, 256], sizes = [128, 128], strides = [1, 1]} : vector<128x384xf32> to vector<128x128xf32>
    %16 = tpu.concatenate %15, %15, %15, %15, %15, %15, %15, %15 in 1 : vector<128x128xf32>, vector<128x128xf32>, vector<128x128xf32>, vector<128x128xf32>, vector<128x128xf32>, vector<128x128xf32>, vector<128x128xf32>, vector<128x128xf32> -> vector<128x1024xf32>
    %17 = vector.extract_strided_slice %3 {offsets = [2, 0], sizes = [1, 1024], strides = [1, 1]} : vector<4x1024xf32> to vector<1x1024xf32>
    %18 = vector.broadcast %17 : vector<1x1024xf32> to vector<128x1024xf32>
    %19 = arith.mulf %16, %18 : vector<128x1024xf32>
    %20 = arith.addf %14, %19 : vector<128x1024xf32>
    %21 = vector.extract_strided_slice %3 {offsets = [3, 0], sizes = [1, 1024], strides = [1, 1]} : vector<4x1024xf32> to vector<1x1024xf32>
    %22 = vector.broadcast %21 : vector<1x1024xf32> to vector<128x1024xf32>
    %23 = arith.addf %20, %22 : vector<128x1024xf32>
    %cst_5 = arith.constant 0.000000e+00 : f32
    %24 = vector.broadcast %cst_5 : f32 to vector<128x1024xf32>
    %25 = arith.maximumf %23, %24 : vector<128x1024xf32>
    %c0_6 = arith.constant 0 : index
    %c0_7 = arith.constant 0 : index
    %26 = vector.load %arg4[%c0_6, %c0_7] : memref<1024x128xf32, #tpu.memory_space<vmem>>, vector<1024x128xf32>
    %cst_8 = arith.constant dense<0.000000e+00> : vector<128x128xf32>
    %27 = tpu.matmul %25, %26, %cst_8 {dimension_numbers = #tpu.dot_dimension_numbers<[1], [0], [0], [1], [0, 0, 1, 1], [], []>} : vector<128x1024xf32>, vector<1024x128xf32>, vector<128x128xf32> -> vector<128x128xf32>
    %c0_9 = arith.constant 0 : index
    %c0_10 = arith.constant 0 : index
    %28 = vector.load %arg5[%c0_9, %c0_10] : memref<1x128xf32, #tpu.memory_space<vmem>>, vector<1x128xf32>
    %29 = vector.broadcast %28 : vector<1x128xf32> to vector<128x128xf32>
    %30 = arith.addf %27, %29 : vector<128x128xf32>
    %31 = tpu.iota {dimensions = array<i32: 1>} : vector<128x128xi32>
    %c10_i32 = arith.constant 10 : i32
    %32 = vector.broadcast %c10_i32 : i32 to vector<128x128xi32>
    %33 = arith.cmpi slt, %31, %32 : vector<128x128xi32>
    %cst_11 = arith.constant 0xFF800000 : f32
    %34 = vector.broadcast %cst_11 : f32 to vector<128x128xf32>
    %35 = arith.select %33, %30, %34 : vector<128x128xi1>, vector<128x128xf32>
    %cst_12 = arith.constant dense<0xFF800000> : vector<128xf32>
    %36 = vector.multi_reduction <maximumf>, %35, %cst_12 [1] : vector<128x128xf32> to vector<128xf32>
    %37 = vector.shape_cast %36 : vector<128xf32> to vector<128x1xf32>
    %38 = vector.broadcast %37 : vector<128x1xf32> to vector<128x128xf32>
    %39 = arith.subf %35, %38 : vector<128x128xf32>
    %40 = math.exp %39 : vector<128x128xf32>
    %cst_13 = arith.constant dense<0.000000e+00> : vector<128xf32>
    %41 = vector.multi_reduction <add>, %40, %cst_13 [1] : vector<128x128xf32> to vector<128xf32>
    %42 = vector.shape_cast %41 : vector<128xf32> to vector<128x1xf32>
    %43 = math.log %42 : vector<128x1xf32>
    %44 = arith.addf %37, %43 : vector<128x1xf32>
    %45 = vector.broadcast %44 : vector<128x1xf32> to vector<128x128xf32>
    %46 = arith.subf %35, %45 : vector<128x128xf32>
    %c0_14 = arith.constant 0 : index
    %c0_15 = arith.constant 0 : index
    %47 = vector.load %arg6[%c0_14, %c0_15] : memref<128x128xf32, #tpu.memory_space<vmem>>, vector<128x128xf32>
    tpu.vector_store %arg6[%c0_14, %c0_15], %46 {strides = array<i32>} : memref<128x128xf32, #tpu.memory_space<vmem>>, vector<128x128xf32>,
    return
  }
  func.func @transform_0(%arg0: i32) -> (i32, i32) {
    %c0_i32 = arith.constant 0 : i32
    %c0_i32_0 = arith.constant 0 : i32
    return %arg0, %c0_i32 : i32, i32
  }
  func.func @transform_1(%arg0: i32) -> (i32, i32) {
    %c0_i32 = arith.constant 0 : i32
    %c0_i32_0 = arith.constant 0 : i32
    %c0_i32_1 = arith.constant 0 : i32
    return %c0_i32, %c0_i32_0 : i32, i32
  }
  func.func @transform_2(%arg0: i32) -> (i32, i32) {
    %c0_i32 = arith.constant 0 : i32
    %c0_i32_0 = arith.constant 0 : i32
    %c0_i32_1 = arith.constant 0 : i32
    return %c0_i32, %c0_i32_0 : i32, i32
  }
  func.func @transform_3(%arg0: i32) -> (i32, i32) {
    %c0_i32 = arith.constant 0 : i32
    %c0_i32_0 = arith.constant 0 : i32
    %c0_i32_1 = arith.constant 0 : i32
    return %c0_i32, %c0_i32_0 : i32, i32
  }
  func.func @transform_4(%arg0: i32) -> (i32, i32) {
    %c0_i32 = arith.constant 0 : i32
    %c0_i32_0 = arith.constant 0 : i32
    %c0_i32_1 = arith.constant 0 : i32
    return %c0_i32, %c0_i32_0 : i32, i32
  }
  func.func @transform_5(%arg0: i32) -> (i32, i32) {
    %c0_i32 = arith.constant 0 : i32
    %c0_i32_0 = arith.constant 0 : i32
    return %arg0, %c0_i32 : i32, i32
  }
}

</mosaic_0001>

<llo_original>
// kernel: net_forward.1
$region0: #{net_forward.1}
  #allocation0 [shape = 'u32[]', space=smem, size = 0x4, offset = 0x4, fixed_abs, tag = 'smem constant byte address 0x4 - core index']
  #allocation1 [shape = 'u32[144,128]{1,0:T(1,128)}', space=vmem, size = 0x12000, scoped, tag = 'internal scratch']
  %s0 = inlined_call_operand.hbm [shape: f32[256,128], index: 0, kind: input, shape index: {}]
  %s1 = inlined_call_operand.hbm [shape: f32[128,384], index: 1, kind: input, shape index: {}]
  %s2 = inlined_call_operand.hbm [shape: f32[4,1024], index: 2, kind: input, shape index: {}]
  %s3 = inlined_call_operand.hbm [shape: f32[1024,128], index: 3, kind: input, shape index: {}]
  %s4 = inlined_call_operand.vmem [shape: f32[1,128], index: 4, kind: input, shape index: {}]
  %s5 = inlined_call_operand.vmem [shape: f32[256,128], index: 5, kind: output, shape index: {}]
  %s6 = sld [smem:[#allocation0]]
  $region69: #{net_forward.1} parent=0
    _
  %s8 = ssub.s32 1, %s6
  %s9 = scalar_select 0, %s8, %s6
  $region1: #{net_forward.1} parent=0
    #allocation2 [shape = 'u8[131072]{0}', space=vmem, size = 0x20000, scoped, tag = 'input window, operand 0']
    #allocation3 [shape = 's32[2]{0}', space=sflag, size = 0x8, scoped, tag = 'scoped memory for net_forward.1']
    #allocation4 [shape = 'u8[196608]{0}', space=vmem, size = 0x30000, scoped, tag = 'input window, operand 1, single buffered']
    #allocation5 [shape = 's32[1]{0}', space=sflag, size = 0x4, scoped, tag = 'scoped memory for net_forward.1']
    #allocation6 [shape = 'u8[16384]{0}', space=vmem, size = 0x4000, scoped, tag = 'input window, operand 2, single buffered']
    #allocation7 [shape = 'u8[524288]{0}', space=vmem, size = 0x80000, scoped, tag = 'input window, operand 3, single buffered']
    #allocation8 [shape = 's32[1]{0}', space=sflag, size = 0x4, scoped, tag = 'scoped memory for net_forward.1']
    %10 = vsyncpa [#allocation3], 0
    %s11 = scalar_lea.sflag [#allocation3], 1
    %12 = vsyncpa %s11, 0
    %13 = vsyncpa [#allocation5], 0
    %14 = vsyncpa [#allocation8], 0
    loop: start=0, step=1, limit=4
    $region2: #{net_forward.1} parent=1 // loop_pre_header
      _
    $region3: #{net_forward.1} parent=1 // loop_header
      %s16 = sphi 0, %s20
      %p17 = scmp.ge.s32.totalorder %s16, 4
      %s26 = sphi 0, %s28
      %s29 = sphi 0, %s26
      %s30 = sphi 0, %s29
      %s46 = sphi 0, %s30
      %s50 = sphi 0, %s50
      %s52 = sphi 0, %s50
      %s53 = sphi 0, %s52
      %s67 = sphi 0, %s53
      %s71 = sphi 0, %s71
      %s73 = sphi 0, %s71
      %s74 = sphi 0, %s73
      %s88 = sphi 0, %s74
      %s92 = sphi 0, %s92
      %s94 = sphi 0, %s92
      %s95 = sphi 0, %s94
      %s109 = sphi 0, %s95
      %s113 = sphi 0, %s113
      %s115 = sphi 0, %s113
      %s116 = sphi 0, %s115
      %s130 = sphi 0, %s116
      %s136 = sphi 0, %s138
      %s139 = sphi 0, %s136
      %s140 = sphi 0, %s139
      %s156 = sphi 0, %s140
    $region4: #{net_forward.1} parent=1 // loop_header_branch
      %19 = sbr.rel (%p17) target = $region8
    $region5: #{net_forward.1} parent=1 // loop_body
      %s21 = ssub.s32 %s16, 1
      %s22 = ssub.s32 %s16, 2
      %s23 = sadd.s32 %s16, 1
      %s24 = ssub.s32 %s16, %s23
      %p25 = scmp.eq.s32.totalorder %s24, 0
      %s27 = sadd.s32 %s26, 1
      %s28 = scalar_select %p25, %s26, %s27
      %p31 = pneg %p25
      %p32 = scmp.eq.s32.totalorder %s16, 1
      %p33 = por %p31, %p32
      %p34 = scmp.ne.s32.totalorder %s26, %s29
      %p35 = scmp.eq.s32.totalorder %s16, 0
      %p36 = por %p34, %p35
      %p37 = scmp.ne.s32.totalorder %s26, %s29
      %p38 = scmp.eq.s32.totalorder %s21, 1
      %p39 = por %p37, %p38
      %p40 = scmp.ne.s32.totalorder %s29, %s30
      %p41 = scmp.eq.s32.totalorder %s21, 0
      %p42 = por %p40, %p41
      %p43 = scmp.ne.s32.totalorder %s29, %s30
      %p44 = scmp.eq.s32.totalorder %s22, 1
      %p45 = por %p43, %p44
      %p47 = scmp.ne.s32.totalorder %s30, %s46
      %p48 = scmp.eq.s32.totalorder %s22, 0
      %p49 = por %p47, %p48
      %s51 = sadd.s32 %s50, 1
      %p54 = scmp.eq.s32.totalorder %s16, 1
      %p55 = scmp.ne.s32.totalorder %s50, %s52
      %p56 = scmp.eq.s32.totalorder %s16, 0
      %p57 = por %p55, %p56
      %p58 = scmp.ne.s32.totalorder %s50, %s52
      %p59 = scmp.eq.s32.totalorder %s21, 1
      %p60 = por %p58, %p59
      %p61 = scmp.ne.s32.totalorder %s52, %s53
      %p62 = scmp.eq.s32.totalorder %s21, 0
      %p63 = por %p61, %p62
      %p64 = scmp.ne.s32.totalorder %s52, %s53
      %p65 = scmp.eq.s32.totalorder %s22, 1
      %p66 = por %p64, %p65
      %p68 = scmp.ne.s32.totalorder %s53, %s67
      %p69 = scmp.eq.s32.totalorder %s22, 0
      %p70 = por %p68, %p69
      %s72 = sadd.s32 %s71, 1
      %p75 = scmp.eq.s32.totalorder %s16, 1
      %p76 = scmp.ne.s32.totalorder %s71, %s73
      %p77 = scmp.eq.s32.totalorder %s16, 0
      %p78 = por %p76, %p77
      %p79 = scmp.ne.s32.totalorder %s71, %s73
      %p80 = scmp.eq.s32.totalorder %s21, 1
      %p81 = por %p79, %p80
      %p82 = scmp.ne.s32.totalorder %s73, %s74
      %p83 = scmp.eq.s32.totalorder %s21, 0
      %p84 = por %p82, %p83
      %p85 = scmp.ne.s32.totalorder %s73, %s74
      %p86 = scmp.eq.s32.totalorder %s22, 1
      %p87 = por %p85, %p86
      %p89 = scmp.ne.s32.totalorder %s74, %s88
      %p90 = scmp.eq.s32.totalorder %s22, 0
      %p91 = por %p89, %p90
      %s93 = sadd.s32 %s92, 1
      %p96 = scmp.eq.s32.totalorder %s16, 1
      %p97 = scmp.ne.s32.totalorder %s92, %s94
      %p98 = scmp.eq.s32.totalorder %s16, 0
      %p99 = por %p97, %p98
      %p100 = scmp.ne.s32.totalorder %s92, %s94
      %p101 = scmp.eq.s32.totalorder %s21, 1
      %p102 = por %p100, %p101
      %p103 = scmp.ne.s32.totalorder %s94, %s95
      %p104 = scmp.eq.s32.totalorder %s21, 0
      %p105 = por %p103, %p104
      %p106 = scmp.ne.s32.totalorder %s94, %s95
      %p107 = scmp.eq.s32.totalorder %s22, 1
      %p108 = por %p106, %p107
      %p110 = scmp.ne.s32.totalorder %s95, %s109
      %p111 = scmp.eq.s32.totalorder %s22, 0
      %p112 = por %p110, %p111
      %s114 = sadd.s32 %s113, 1
      %p117 = scmp.eq.s32.totalorder %s16, 1
      %p118 = scmp.ne.s32.totalorder %s113, %s115
      %p119 = scmp.eq.s32.totalorder %s16, 0
      %p120 = por %p118, %p119
      %p121 = scmp.ne.s32.totalorder %s113, %s115
      %p122 = scmp.eq.s32.totalorder %s21, 1
      %p123 = por %p121, %p122
      %p124 = scmp.ne.s32.totalorder %s115, %s116
      %p125 = scmp.eq.s32.totalorder %s21, 0
      %p126 = por %p124, %p125
      %p127 = scmp.ne.s32.totalorder %s115, %s116
      %p128 = scmp.eq.s32.totalorder %s22, 1
      %p129 = por %p127, %p128
      %p131 = scmp.ne.s32.totalorder %s116, %s130
      %p132 = scmp.eq.s32.totalorder %s22, 0
      %p133 = por %p131, %p132
      %s134 = ssub.s32 %s16, %s23
      %p135 = scmp.eq.s32.totalorder %s134, 0
      %s137 = sadd.s32 %s136, 1
      %s138 = scalar_select %p135, %s136, %s137
      %p141 = pneg %p135
      %p142 = scmp.eq.s32.totalorder %s16, 1
      %p143 = por %p141, %p142
      %p144 = scmp.ne.s32.totalorder %s136, %s139
      %p145 = scmp.eq.s32.totalorder %s16, 0
      %p146 = por %p144, %p145
      %p147 = scmp.ne.s32.totalorder %s136, %s139
      %p148 = scmp.eq.s32.totalorder %s21, 1
      %p149 = por %p147, %p148
      %p150 = scmp.ne.s32.totalorder %s139, %s140
      %p151 = scmp.eq.s32.totalorder %s21, 0
      %p152 = por %p150, %p151
      %p153 = scmp.ne.s32.totalorder %s139, %s140
      %p154 = scmp.eq.s32.totalorder %s22, 1
      %p155 = por %p153, %p154
      %p157 = scmp.ne.s32.totalorder %s140, %s156
      %p158 = scmp.eq.s32.totalorder %s22, 0
      %p159 = por %p157, %p158
      %p160 = scmp.le.s32.totalorder 1, %s16
      %p161 = scmp.lt.s32.totalorder %s16, 3
      %p162 = pnand %p160, %p161
      %p163 = pneg %p162
      // Predicated region
      $region9: #{net_forward.1} parent=5 // pred_check
        _
      $region10: #{net_forward.1} parent=5 // pred_check_branch
        %165 = sbr.rel (%p162) target = $region12
      $region11: #{net_forward.1} parent=5 // pred_region
        %s166 = ssub.s32 %s16, 1
        // Predicated region
        $region13: #{net_forward.1} parent=11 // pred_check
          %p167 = pneg %p63
        $region14: #{net_forward.1} parent=11 // pred_check_branch
          %169 = sbr.rel (%p167) target = $region16
        $region15: #{net_forward.1} parent=11 // pred_region
          %s171 = ssub.s32 6144, 6144
          %172 = vsyncadd [#allocation5], %s171
          %s173 = sshll.u32 [#allocation4], 4
          %s174 = int_to_ptr.vmem [resolvable:$true] %s173
          %179 = dma.hbm_to_vmem [thread:$0]  %s1, 6144, %s174, [#allocation5], 384, 384, 24
        $region16: #{net_forward.1} parent=11 // pred_fallthru
          _
        // Predicated region
        $region17: #{net_forward.1} parent=11 // pred_check
          %p180 = pneg %p84
        $region18: #{net_forward.1} parent=11 // pred_check_branch
          %182 = sbr.rel (%p180) target = $region20
        $region19: #{net_forward.1} parent=11 // pred_region
          %s184 = ssub.s32 512, 512
          %185 = vsyncadd [#allocation5], %s184
          %s187 = sshll.u32 [#allocation6], 4
          %s188 = int_to_ptr.vmem [resolvable:$true] %s187
          %190 = dma.hbm_to_vmem [thread:$0]  %s2, 512, %s188, [#allocation5]
        $region20: #{net_forward.1} parent=11 // pred_fallthru
          _
        // Predicated region
        $region21: #{net_forward.1} parent=11 // pred_check
          %p191 = pneg %p105
        $region22: #{net_forward.1} parent=11 // pred_check_branch
          %193 = sbr.rel (%p191) target = $region24
        $region23: #{net_forward.1} parent=11 // pred_region
          %s195 = ssub.s32 16384, 16384
          %196 = vsyncadd [#allocation8], %s195
          %s197 = sshll.u32 [#allocation7], 4
          %s198 = int_to_ptr.vmem [resolvable:$true] %s197
          %203 = dma.hbm_to_vmem [thread:$0]  %s3, 16384, %s198, [#allocation8], 128, 128, 8
        $region24: #{net_forward.1} parent=11 // pred_fallthru
          _
        // Predicated region
        $region25: #{net_forward.1} parent=11 // pred_check
          %p204 = pneg %p126
        $region26: #{net_forward.1} parent=11 // pred_check_branch
          %206 = sbr.rel (%p204) target = $region28
        $region27: #{net_forward.1} parent=11 // pred_region
          _
        $region28: #{net_forward.1} parent=11 // pred_fallthru
          _
      $region12: #{net_forward.1} parent=5 // pred_fallthru
        _
      %p207 = scmp.lt.s32.totalorder %s16, 2
      // Predicated region
      $region29: #{net_forward.1} parent=5 // pred_check
        %p208 = pneg %p207
      $region30: #{net_forward.1} parent=5 // pred_check_branch
        %210 = sbr.rel (%p208) target = $region32
      $region31: #{net_forward.1} parent=5 // pred_region
        // Predicated region
        $region33: #{net_forward.1} parent=31 // pred_check
          %p211 = pneg %p36
        $region34: #{net_forward.1} parent=31 // pred_check_branch
          %213 = sbr.rel (%p211) target = $region36
        $region35: #{net_forward.1} parent=31 // pred_region
          %s214 = sand.u32 %s26, 1
          %s215 = scalar_lea.sflag [#allocation3], %s214
          %s216 = sand.u32 %s26, 1
          %s217 = smul.addr %s216, 128
          %s218 = scalar_lea.vmem [#allocation2], %s217
          %s219 = smul.u32 16, %s16
          %s221 = ssub.s32 2048, 2048
          %222 = vsyncadd %s215, %s221
          %s223 = smul.addr %s219, 128
          %s224 = scalar_lea.hbm %s0, %s223
          %s225 = sshll.u32 %s218, 4
          %s226 = int_to_ptr.vmem [resolvable:$true] %s225
          %231 = dma.hbm_to_vmem [thread:$0]  %s224, 2048, %s226, %s215, 128, 128, 8
        $region36: #{net_forward.1} parent=31 // pred_fallthru
          _
      $region32: #{net_forward.1} parent=5 // pred_fallthru
        _
      %p232 = scmp.le.s32.totalorder 1, %s16
      %p233 = scmp.lt.s32.totalorder %s16, 3
      %p234 = pnand %p232, %p233
      %p235 = pneg %p234
      // Predicated region
      $region37: #{net_forward.1} parent=5 // pred_check
        _
      $region38: #{net_forward.1} parent=5 // pred_check_branch
        %237 = sbr.rel (%p234) target = $region40
      $region39: #{net_forward.1} parent=5 // pred_region
        %s238 = ssub.s32 %s16, 1
        %s239 = sand.u32 %s29, 1
        %s240 = scalar_lea.sflag [#allocation3], %s239
        %s241 = sand.u32 %s29, 1
        %s242 = smul.addr %s241, 128
        %s243 = scalar_lea.vmem [#allocation2], %s242
        // Predicated region
        $region41: #{net_forward.1} parent=39 // pred_check
          %p244 = pneg %p42
        $region42: #{net_forward.1} parent=39 // pred_check_branch
          %246 = sbr.rel (%p244) target = $region44
        $region43: #{net_forward.1} parent=39 // pred_region
          %247 = dma.done %s240, 2048
        $region44: #{net_forward.1} parent=39 // pred_fallthru
          _
        // Predicated region
        $region45: #{net_forward.1} parent=39 // pred_check
          %p248 = pneg %p63
        $region46: #{net_forward.1} parent=39 // pred_check_branch
          %250 = sbr.rel (%p248) target = $region48
        $region47: #{net_forward.1} parent=39 // pred_region
          %251 = dma.done [#allocation5], 6144
        $region48: #{net_forward.1} parent=39 // pred_fallthru
          _
        // Predicated region
        $region49: #{net_forward.1} parent=39 // pred_check
          %p252 = pneg %p84
        $region50: #{net_forward.1} parent=39 // pred_check_branch
          %254 = sbr.rel (%p252) target = $region52
        $region51: #{net_forward.1} parent=39 // pred_region
          %255 = dma.done [#allocation5], 512
        $region52: #{net_forward.1} parent=39 // pred_fallthru
          _
        // Predicated region
        $region53: #{net_forward.1} parent=39 // pred_check
          %p256 = pneg %p105
        $region54: #{net_forward.1} parent=39 // pred_check_branch
          %258 = sbr.rel (%p256) target = $region56
        $region55: #{net_forward.1} parent=39 // pred_region
          %259 = dma.done [#allocation8], 16384
        $region56: #{net_forward.1} parent=39 // pred_fallthru
          _
        %s260 = sand.u32 %s29, 1
        %s261 = scalar_lea.sflag [#allocation3], %s260
        %s262 = sand.u32 %s29, 1
        %s263 = smul.addr %s262, 128
        %s264 = scalar_lea.vmem [#allocation2], %s263
        %p265 = pneg %p42
        %p266 = pneg %p39
        %p267 = pneg %p63
        %p268 = pneg %p60
        %p269 = pneg %p84
        %p270 = pneg %p81
        %p271 = pneg %p105
        %p272 = pneg %p102
        %p273 = pneg %p126
        %p274 = pneg %p123
        %p275 = pneg %p152
        %p276 = pneg %p149
        %s277 = smul.u32 16, %s21
        %p278 = scmp.lt.s32.totalorder %s277, 31
        %s279 = scalar_select %p278, %s277, 31
        %s280 = smul.addr %s279, 8
        %s281 = scalar_lea.vmem %s5, %s280
        %s282 = smul.u32 16, %s21
        %s283 = smul.u32 16, %s21
        %p284 = scmp.lt.s32.totalorder %s283, 31
        %s285 = scalar_select %p284, %s283, 31
        %s286 = smul.addr %s285, 8
        %s287 = scalar_lea.vmem %s5, %s286
        %s288 = smul.u32 16, %s21
        %v289 = vld [vmem:[%s243] sm:$0xff]
        %v290 = vld [vmem:[%s243 + $0x8] sm:$0xff]
        %v291 = vld [vmem:[%s243 + $0x10] sm:$0xff]
        %v292 = vld [vmem:[%s243 + $0x18] sm:$0xff]
        %v293 = vld [vmem:[%s243 + $0x20] sm:$0xff]
        %v294 = vld [vmem:[%s243 + $0x28] sm:$0xff]
        %v295 = vld [vmem:[%s243 + $0x30] sm:$0xff]
        %v296 = vld [vmem:[%s243 + $0x38] sm:$0xff]
        %v297 = vld [vmem:[%s243 + $0x40] sm:$0xff]
        %v298 = vld [vmem:[%s243 + $0x48] sm:$0xff]
        %v299 = vld [vmem:[%s243 + $0x50] sm:$0xff]
        %v300 = vld [vmem:[%s243 + $0x58] sm:$0xff]
        %v301 = vld [vmem:[%s243 + $0x60] sm:$0xff]
        %v302 = vld [vmem:[%s243 + $0x68] sm:$0xff]
        %v303 = vld [vmem:[%s243 + $0x70] sm:$0xff]
        %v304 = vld [vmem:[%s243 + $0x78] sm:$0xff]
        %v305 = vld [vmem:[#allocation4] sm:$0xff]
        %v306 = vld [vmem:[#allocation4 + $0x8] sm:$0xff]
        %v307 = vld [vmem:[#allocation4 + $0x10] sm:$0xff]
        %v308 = vld [vmem:[#allocation4 + $0x18] sm:$0xff]
        %v309 = vld [vmem:[#allocation4 + $0x20] sm:$0xff]
        %v310 = vld [vmem:[#allocation4 + $0x28] sm:$0xff]
        %v311 = vld [vmem:[#allocation4 + $0x30] sm:$0xff]
        %v312 = vld [vmem:[#allocation4 + $0x38] sm:$0xff]
        %v313 = vld [vmem:[#allocation4 + $0x40] sm:$0xff]
        %v314 = vld [vmem:[#allocation4 + $0x48] sm:$0xff]
        %v315 = vld [vmem:[#allocation4 + $0x50] sm:$0xff]
        %v316 = vld [vmem:[#allocation4 + $0x58] sm:$0xff]
        %v317 = vld [vmem:[#allocation4 + $0x60] sm:$0xff]
        %v318 = vld [vmem:[#allocation4 + $0x68] sm:$0xff]
        %v319 = vld [vmem:[#allocation4 + $0x70] sm:$0xff]
        %v320 = vld [vmem:[#allocation4 + $0x78] sm:$0xff]
        %v321 = vld [vmem:[#allocation4 + $0x80] sm:$0xff]
        %v322 = vld [vmem:[#allocation4 + $0x88] sm:$0xff]
        %v323 = vld [vmem:[#allocation4 + $0x90] sm:$0xff]
        %v324 = vld [vmem:[#allocation4 + $0x98] sm:$0xff]
        %v325 = vld [vmem:[#allocation4 + $0xa0] sm:$0xff]
        %v326 = vld [vmem:[#allocation4 + $0xa8] sm:$0xff]
        %v327 = vld [vmem:[#allocation4 + $0xb0] sm:$0xff]
        %v328 = vld [vmem:[#allocation4 + $0xb8] sm:$0xff]
        %v329 = vld [vmem:[#allocation4 + $0xc0] sm:$0xff]
        %v330 = vld [vmem:[#allocation4 + $0xc8] sm:$0xff]
        %v331 = vld [vmem:[#allocation4 + $0xd0] sm:$0xff]
        %v332 = vld [vmem:[#allocation4 + $0xd8] sm:$0xff]
        %v333 = vld [vmem:[#allocation4 + $0xe0] sm:$0xff]
        %v334 = vld [vmem:[#allocation4 + $0xe8] sm:$0xff]
        %v335 = vld [vmem:[#allocation4 + $0xf0] sm:$0xff]
        %v336 = vld [vmem:[#allocation4 + $0xf8] sm:$0xff]
        %v337 = vld [vmem:[#allocation4 + $0x100] sm:$0xff]
        %v338 = vld [vmem:[#allocation4 + $0x108] sm:$0xff]
        %v339 = vld [vmem:[#allocation4 + $0x110] sm:$0xff]
        %v340 = vld [vmem:[#allocation4 + $0x118] sm:$0xff]
        %v341 = vld [vmem:[#allocation4 + $0x120] sm:$0xff]
        %v342 = vld [vmem:[#allocation4 + $0x128] sm:$0xff]
        %v343 = vld [vmem:[#allocation4 + $0x130] sm:$0xff]
        %v344 = vld [vmem:[#allocation4 + $0x138] sm:$0xff]
        %v345 = vld [vmem:[#allocation4 + $0x140] sm:$0xff]
        %v346 = vld [vmem:[#allocation4 + $0x148] sm:$0xff]
        %v347 = vld [vmem:[#allocation4 + $0x150] sm:$0xff]
        %v348 = vld [vmem:[#allocation4 + $0x158] sm:$0xff]
        %v349 = vld [vmem:[#allocation4 + $0x160] sm:$0xff]
        %v350 = vld [vmem:[#allocation4 + $0x168] sm:$0xff]
        %v351 = vld [vmem:[#allocation4 + $0x170] sm:$0xff]
        %v352 = vld [vmem:[#allocation4 + $0x178] sm:$0xff]
        %353 = vmatprep.subr.mxu0 %v306
        %354 = vmatpush1.msra.mxu0 %v305
        %355 = vmatprep.subr.mxu0 %v309
        %356 = vmatpush1.msra.mxu0 %v308
        %357 = vmatprep.subr.mxu0 %v312
        %358 = vmatpush1.msra.mxu0 %v311
        %359 = vmatprep.subr.mxu0 %v315
        %360 = vmatpush1.msra.mxu0 %v314
        %361 = vmatprep.subr.mxu0 %v318
        %362 = vmatpush1.msra.mxu0 %v317
        %363 = vmatprep.subr.mxu0 %v321
        %364 = vmatpush1.msra.mxu0 %v320
        %365 = vmatprep.subr.mxu0 %v324
        %366 = vmatpush1.msra.mxu0 %v323
        %367 = vmatprep.subr.mxu0 %v327
        %368 = vmatpush1.msra.mxu0 %v326
        %369 = vmatprep.subr.mxu0 %v330
        %370 = vmatpush1.msra.mxu0 %v329
        %371 = vmatprep.subr.mxu0 %v333
        %372 = vmatpush1.msra.mxu0 %v332
        %373 = vmatprep.subr.mxu0 %v336
        %374 = vmatpush1.msra.mxu0 %v335
        %375 = vmatprep.subr.mxu0 %v339
        %376 = vmatpush1.msra.mxu0 %v338
        %377 = vmatprep.subr.mxu0 %v342
        %378 = vmatpush1.msra.mxu0 %v341
        %379 = vmatprep.subr.mxu0 %v345
        %380 = vmatpush1.msra.mxu0 %v344
        %381 = vmatprep.subr.mxu0 %v348
        %382 = vmatpush1.msra.mxu0 %v347
        %383 = vmatprep.subr.mxu0 %v351
        %384 = vmatpush1.msra.mxu0 %v350
        %385 = vmatprep.subr.mxu0 0.0
        %386 = vmatpush1.msra.mxu0 0.0
        %387 = vmatprep.subr.mxu0 0.0
        %388 = vmatpush1.msra.mxu0 0.0
        %389 = vmatprep.subr.mxu0 0.0
        %390 = vmatpush1.msra.mxu0 0.0
        %391 = vmatprep.subr.mxu0 0.0
        %392 = vmatpush1.msra.mxu0 0.0
        %393 = vmatprep.subr.mxu0 0.0
        %394 = vmatpush1.msra.mxu0 0.0
        %395 = vmatprep.subr.mxu0 0.0
        %396 = vmatpush1.msra.mxu0 0.0
        %397 = vmatprep.subr.mxu0 0.0
        %398 = vmatpush1.msra.mxu0 0.0
        %399 = vmatprep.subr.mxu0 0.0
        %400 = vmatpush1.msra.mxu0 0.0
        %401 = vmatprep.subr.mxu0 0.0
        %402 = vmatpush1.msra.mxu0 0.0
        %403 = vmatprep.subr.mxu0 0.0
        %404 = vmatpush1.msra.mxu0 0.0
        %405 = vmatprep.subr.mxu0 0.0
        %406 = vmatpush1.msra.mxu0 0.0
        %407 = vmatprep.subr.mxu0 0.0
        %408 = vmatpush1.msra.mxu0 0.0
        %409 = vmatprep.subr.mxu0 0.0
        %410 = vmatpush1.msra.mxu0 0.0
        %411 = vmatprep.subr.mxu0 0.0
        %412 = vmatpush1.msra.mxu0 0.0
        %413 = vmatprep.subr.mxu0 0.0
        %414 = vmatpush1.msra.mxu0 0.0
        %415 = vmatprep.subr.mxu0 0.0
        %416 = vmatpush1.msra.mxu0 0.0
        %417 = vmatprep.mubr.f32.mxu0 0.0
        %418 = vmatmul.mubr.f32.gmra.mrb[0].mxu0 %v289
        %v419 = vpop.f32.mrb[0].mxu0
        %v420 = vadd.f32 0.0, %v419
        %v421 = vpop.f32.mrb[0].mxu0
        %v422 = vadd.f32 0.0, %v421
        %423 = vmatprep.mubr.f32.mxu0 0.0
        %424 = vmatmul.mubr.f32.gmra.mrb[0].mxu0 %v290
        %v425 = vpop.f32.mrb[0].mxu0
        %v426 = vadd.f32 0.0, %v425
        %v427 = vpop.f32.mrb[0].mxu0
        %v428 = vadd.f32 0.0, %v427
        %429 = vmatprep.mubr.f32.mxu0 0.0
        %430 = vmatmul.mubr.f32.gmra.mrb[0].mxu0 %v291
        %v431 = vpop.f32.mrb[0].mxu0
        %v432 = vadd.f32 0.0, %v431
        %v433 = vpop.f32.mrb[0].mxu0
        %v434 = vadd.f32 0.0, %v433
        %435 = vmatprep.mubr.f32.mxu0 0.0
        %436 = vmatmul.mubr.f32.gmra.mrb[0].mxu0 %v292
        %v437 = vpop.f32.mrb[0].mxu0
        %v438 = vadd.f32 0.0, %v437
        %v439 = vpop.f32.mrb[0].mxu0
        %v440 = vadd.f32 0.0, %v439
        %441 = vmatprep.mubr.f32.mxu0 0.0
        %442 = vmatmul.mubr.f32.gmra.mrb[0].mxu0 %v293
        %v443 = vpop.f32.mrb[0].mxu0
        %v444 = vadd.f32 0.0, %v443
        %v445 = vpop.f32.mrb[0].mxu0
        %v446 = vadd.f32 0.0, %v445
        %447 = vmatprep.mubr.f32.mxu0 0.0
        %448 = vmatmul.mubr.f32.gmra.mrb[0].mxu0 %v294
        %v449 = vpop.f32.mrb[0].mxu0
        %v450 = vadd.f32 0.0, %v449
        %v451 = vpop.f32.mrb[0].mxu0
        %v452 = vadd.f32 0.0, %v451
        %453 = vmatprep.mubr.f32.mxu0 0.0
        %454 = vmatmul.mubr.f32.gmra.mrb[0].mxu0 %v295
        %v455 = vpop.f32.mrb[0].mxu0
        %v456 = vadd.f32 0.0, %v455
        %v457 = vpop.f32.mrb[0].mxu0
        %v458 = vadd.f32 0.0, %v457
        %459 = vmatprep.mubr.f32.mxu0 0.0
        %460 = vmatmul.mubr.f32.gmra.mrb[0].mxu0 %v296
        %v461 = vpop.f32.mrb[0].mxu0
        %v462 = vadd.f32 0.0, %v461
        %v463 = vpop.f32.mrb[0].mxu0
        %v464 = vadd.f32 0.0, %v463
        %465 = vmatprep.mubr.f32.mxu0 0.0
        %466 = vmatmul.mubr.f32.gmra.mrb[0].mxu0 %v297
        %v467 = vpop.f32.mrb[0].mxu0
        %v468 = vadd.f32 0.0, %v467
        %v469 = vpop.f32.mrb[0].mxu0
        %v470 = vadd.f32 0.0, %v469
        %471 = vmatprep.mubr.f32.mxu0 0.0
        %472 = vmatmul.mubr.f32.gmra.mrb[0].mxu0 %v298
        %v473 = vpop.f32.mrb[0].mxu0
        %v474 = vadd.f32 0.0, %v473
        %v475 = vpop.f32.mrb[0].mxu0
        %v476 = vadd.f32 0.0, %v475
        %477 = vmatprep.mubr.f32.mxu0 0.0
        %478 = vmatmul.mubr.f32.gmra.mrb[0].mxu0 %v299
        %v479 = vpop.f32.mrb[0].mxu0
        %v480 = vadd.f32 0.0, %v479
        %v481 = vpop.f32.mrb[0].mxu0
        %v482 = vadd.f32 0.0, %v481
        %483 = vmatprep.mubr.f32.mxu0 0.0
        %484 = vmatmul.mubr.f32.gmra.mrb[0].mxu0 %v300
        %v485 = vpop.f32.mrb[0].mxu0
        %v486 = vadd.f32 0.0, %v485
        %v487 = vpop.f32.mrb[0].mxu0
        %v488 = vadd.f32 0.0, %v487
        %489 = vmatprep.mubr.f32.mxu0 0.0
        %490 = vmatmul.mubr.f32.gmra.mrb[0].mxu0 %v301
        %v491 = vpop.f32.mrb[0].mxu0
        %v492 = vadd.f32 0.0, %v491
        %v493 = vpop.f32.mrb[0].mxu0
        %v494 = vadd.f32 0.0, %v493
        %495 = vmatprep.mubr.f32.mxu0 0.0
        %496 = vmatmul.mubr.f32.gmra.mrb[0].mxu0 %v302
        %v497 = vpop.f32.mrb[0].mxu0
        %v498 = vadd.f32 0.0, %v497
        %v499 = vpop.f32.mrb[0].mxu0
        %v500 = vadd.f32 0.0, %v499
        %501 = vmatprep.mubr.f32.mxu0 0.0
        %502 = vmatmul.mubr.f32.gmra.mrb[0].mxu0 %v303
        %v503 = vpop.f32.mrb[0].mxu0
        %v504 = vadd.f32 0.0, %v503
        %v505 = vpop.f32.mrb[0].mxu0
        %v506 = vadd.f32 0.0, %v505
        %507 = vmatprep.mubr.f32.mxu0 0.0
        %508 = vmatmul.mubr.f32.gmra.mrb[0].mxu0 %v304
        %v509 = vpop.f32.mrb[0].mxu0
        %v510 = vadd.f32 0.0, %v509
        %v511 = vpop.f32.mrb[0].mxu0
        %v512 = vadd.f32 0.0, %v511
        %513 = vdwg.mxu0
        %514 = vmatprep.subr.mxu0 0.0
        %515 = vmatpush1.msra.mxu0 %v307
        %516 = vmatprep.subr.mxu0 0.0
        %517 = vmatpush1.msra.mxu0 %v310
        %518 = vmatprep.subr.mxu0 0.0
        %519 = vmatpush1.msra.mxu0 %v313
        %520 = vmatprep.subr.mxu0 0.0
        %521 = vmatpush1.msra.mxu0 %v316
        %522 = vmatprep.subr.mxu0 0.0
        %523 = vmatpush1.msra.mxu0 %v319
        %524 = vmatprep.subr.mxu0 0.0
        %525 = vmatpush1.msra.mxu0 %v322
        %526 = vmatprep.subr.mxu0 0.0
        %527 = vmatpush1.msra.mxu0 %v325
        %528 = vmatprep.subr.mxu0 0.0
        %529 = vmatpush1.msra.mxu0 %v328
        %530 = vmatprep.subr.mxu0 0.0
        %531 = vmatpush1.msra.mxu0 %v331
        %532 = vmatprep.subr.mxu0 0.0
        %533 = vmatpush1.msra.mxu0 %v334
        %534 = vmatprep.subr.mxu0 0.0
        %535 = vmatpush1.msra.mxu0 %v337
        %536 = vmatprep.subr.mxu0 0.0
        %537 = vmatpush1.msra.mxu0 %v340
        %538 = vmatprep.subr.mxu0 0.0
        %539 = vmatpush1.msra.mxu0 %v343
        %540 = vmatprep.subr.mxu0 0.0
        %541 = vmatpush1.msra.mxu0 %v346
        %542 = vmatprep.subr.mxu0 0.0
        %543 = vmatpush1.msra.mxu0 %v349
        %544 = vmatprep.subr.mxu0 0.0
        %545 = vmatpush1.msra.mxu0 %v352
        %546 = vmatprep.subr.mxu0 0.0
        %547 = vmatpush1.msra.mxu0 0.0
        %548 = vmatprep.subr.mxu0 0.0
        %549 = vmatpush1.msra.mxu0 0.0
        %550 = vmatprep.subr.mxu0 0.0
        %551 = vmatpush1.msra.mxu0 0.0
        %552 = vmatprep.subr.mxu0 0.0
        %553 = vmatpush1.msra.mxu0 0.0
        %554 = vmatprep.subr.mxu0 0.0
        %555 = vmatpush1.msra.mxu0 0.0
        %556 = vmatprep.subr.mxu0 0.0
        %557 = vmatpush1.msra.mxu0 0.0
        %558 = vmatprep.subr.mxu0 0.0
        %559 = vmatpush1.msra.mxu0 0.0
        %560 = vmatprep.subr.mxu0 0.0
        %561 = vmatpush1.msra.mxu0 0.0
        %562 = vmatprep.subr.mxu0 0.0
        %563 = vmatpush1.msra.mxu0 0.0
        %564 = vmatprep.subr.mxu0 0.0
        %565 = vmatpush1.msra.mxu0 0.0
        %566 = vmatprep.subr.mxu0 0.0
        %567 = vmatpush1.msra.mxu0 0.0
        %568 = vmatprep.subr.mxu0 0.0
        %569 = vmatpush1.msra.mxu0 0.0
        %570 = vmatprep.subr.mxu0 0.0
        %571 = vmatpush1.msra.mxu0 0.0
        %572 = vmatprep.subr.mxu0 0.0
        %573 = vmatpush1.msra.mxu0 0.0
        %574 = vmatprep.subr.mxu0 0.0
        %575 = vmatpush1.msra.mxu0 0.0
        %576 = vmatprep.subr.mxu0 0.0
        %577 = vmatpush1.msra.mxu0 0.0
        %578 = vmatprep.mubr.f32.mxu0 0.0
        %579 = vmatmul.mubr.f32.gmra.mrb[0].mxu0 %v289
        %v580 = vpop.f32.mrb[0].mxu0
        %v581 = vadd.f32 0.0, %v580
        %v582 = vpop.f32.mrb[0].mxu0
        %583 = vmatprep.mubr.f32.mxu0 0.0
        %584 = vmatmul.mubr.f32.gmra.mrb[0].mxu0 %v290
        %v585 = vpop.f32.mrb[0].mxu0
        %v586 = vadd.f32 0.0, %v585
        %v587 = vpop.f32.mrb[0].mxu0
        %588 = vmatprep.mubr.f32.mxu0 0.0
        %589 = vmatmul.mubr.f32.gmra.mrb[0].mxu0 %v291
        %v590 = vpop.f32.mrb[0].mxu0
        %v591 = vadd.f32 0.0, %v590
        %v592 = vpop.f32.mrb[0].mxu0
        %593 = vmatprep.mubr.f32.mxu0 0.0
        %594 = vmatmul.mubr.f32.gmra.mrb[0].mxu0 %v292
        %v595 = vpop.f32.mrb[0].mxu0
        %v596 = vadd.f32 0.0, %v595
        %v597 = vpop.f32.mrb[0].mxu0
        %598 = vmatprep.mubr.f32.mxu0 0.0
        %599 = vmatmul.mubr.f32.gmra.mrb[0].mxu0 %v293
        %v600 = vpop.f32.mrb[0].mxu0
        %v601 = vadd.f32 0.0, %v600
        %v602 = vpop.f32.mrb[0].mxu0
        %603 = vmatprep.mubr.f32.mxu0 0.0
        %604 = vmatmul.mubr.f32.gmra.mrb[0].mxu0 %v294
        %v605 = vpop.f32.mrb[0].mxu0
        %v606 = vadd.f32 0.0, %v605
        %v607 = vpop.f32.mrb[0].mxu0
        %608 = vmatprep.mubr.f32.mxu0 0.0
        %609 = vmatmul.mubr.f32.gmra.mrb[0].mxu0 %v295
        %v610 = vpop.f32.mrb[0].mxu0
        %v611 = vadd.f32 0.0, %v610
        %v612 = vpop.f32.mrb[0].mxu0
        %613 = vmatprep.mubr.f32.mxu0 0.0
        %614 = vmatmul.mubr.f32.gmra.mrb[0].mxu0 %v296
        %v615 = vpop.f32.mrb[0].mxu0
        %v616 = vadd.f32 0.0, %v615
        %v617 = vpop.f32.mrb[0].mxu0
        %618 = vmatprep.mubr.f32.mxu0 0.0
        %619 = vmatmul.mubr.f32.gmra.mrb[0].mxu0 %v297
        %v620 = vpop.f32.mrb[0].mxu0
        %v621 = vadd.f32 0.0, %v620
        %v622 = vpop.f32.mrb[0].mxu0
        %623 = vmatprep.mubr.f32.mxu0 0.0
        %624 = vmatmul.mubr.f32.gmra.mrb[0].mxu0 %v298
        %v625 = vpop.f32.mrb[0].mxu0
        %v626 = vadd.f32 0.0, %v625
        %v627 = vpop.f32.mrb[0].mxu0
        %628 = vmatprep.mubr.f32.mxu0 0.0
        %629 = vmatmul.mubr.f32.gmra.mrb[0].mxu0 %v299
        %v630 = vpop.f32.mrb[0].mxu0
        %v631 = vadd.f32 0.0, %v630
        %v632 = vpop.f32.mrb[0].mxu0
        %633 = vmatprep.mubr.f32.mxu0 0.0
        %634 = vmatmul.mubr.f32.gmra.mrb[0].mxu0 %v300
        %v635 = vpop.f32.mrb[0].mxu0
        %v636 = vadd.f32 0.0, %v635
        %v637 = vpop.f32.mrb[0].mxu0
        %638 = vmatprep.mubr.f32.mxu0 0.0
        %639 = vmatmul.mubr.f32.gmra.mrb[0].mxu0 %v301
        %v640 = vpop.f32.mrb[0].mxu0
        %v641 = vadd.f32 0.0, %v640
        %v642 = vpop.f32.mrb[0].mxu0
        %643 = vmatprep.mubr.f32.mxu0 0.0
        %644 = vmatmul.mubr.f32.gmra.mrb[0].mxu0 %v302
        %v645 = vpop.f32.mrb[0].mxu0
        %v646 = vadd.f32 0.0, %v645
        %v647 = vpop.f32.mrb[0].mxu0
        %648 = vmatprep.mubr.f32.mxu0 0.0
        %649 = vmatmul.mubr.f32.gmra.mrb[0].mxu0 %v303
        %v650 = vpop.f32.mrb[0].mxu0
        %v651 = vadd.f32 0.0, %v650
        %v652 = vpop.f32.mrb[0].mxu0
        %653 = vmatprep.mubr.f32.mxu0 0.0
        %654 = vmatmul.mubr.f32.gmra.mrb[0].mxu0 %v304
        %v655 = vpop.f32.mrb[0].mxu0
        %v656 = vadd.f32 0.0, %v655
        %v657 = vpop.f32.mrb[0].mxu0
        %658 = vdwg.mxu0
        %v659 = vld [vmem:[#allocation6] sm:$0xff]
        %v660 = vld [vmem:[#allocation6 + $0x8] sm:$0xff]
        %v661 = vld [vmem:[#allocation6 + $0x10] sm:$0xff]
        %v662 = vld [vmem:[#allocation6 + $0x18] sm:$0xff]
        %v667 = vlaneseq
        %v668 = vshrl.u32 %v667, 7
        %v669 = vsub.s32 0, %v668
        %v670 = vrot.slane %v659, %v669
        %v671 = vlaneseq
        %v672 = vshrl.u32 %v671, 7
        %v673 = vsub.s32 4, %v672
        %v674 = vrot.slane %v659, %v673
        %v675 = vlaneseq
        %v676 = vshrl.u32 %v675, 7
        %v677 = vsub.s32 0, %v676
        %v678 = vrot.slane %v660, %v677
        %v679 = vlaneseq
        %v680 = vshrl.u32 %v679, 7
        %v681 = vsub.s32 4, %v680
        %v682 = vrot.slane %v660, %v681
        %v683 = vlaneseq
        %v684 = vshrl.u32 %v683, 7
        %v685 = vsub.s32 0, %v684
        %v686 = vrot.slane %v661, %v685
        %v687 = vlaneseq
        %v688 = vshrl.u32 %v687, 7
        %v689 = vsub.s32 4, %v688
        %v690 = vrot.slane %v661, %v689
        %v691 = vlaneseq
        %v692 = vshrl.u32 %v691, 7
        %v693 = vsub.s32 0, %v692
        %v694 = vrot.slane %v662, %v693
        %v695 = vlaneseq
        %v696 = vshrl.u32 %v695, 7
        %v697 = vsub.s32 4, %v696
        %v698 = vrot.slane %v662, %v697
        %v707 = vlaneseq
        %v708 = vshrl.u32 %v707, 7
        %v709 = vsub.s32 0, %v708
        %v710 = vrot.slane %v670, %v709
        %v711 = vlaneseq
        %v712 = vshrl.u32 %v711, 7
        %v713 = vsub.s32 0, %v712
        %v714 = vrot.slane %v674, %v713
        %v715 = vlaneseq
        %v716 = vshrl.u32 %v715, 7
        %v717 = vsub.s32 0, %v716
        %v718 = vrot.slane %v678, %v717
        %v719 = vlaneseq
        %v720 = vshrl.u32 %v719, 7
        %v721 = vsub.s32 0, %v720
        %v722 = vrot.slane %v682, %v721
        %v723 = vlaneseq
        %v724 = vshrl.u32 %v723, 7
        %v725 = vsub.s32 0, %v724
        %v726 = vrot.slane %v686, %v725
        %v727 = vlaneseq
        %v728 = vshrl.u32 %v727, 7
        %v729 = vsub.s32 0, %v728
        %v730 = vrot.slane %v690, %v729
        %v731 = vlaneseq
        %v732 = vshrl.u32 %v731, 7
        %v733 = vsub.s32 0, %v732
        %v734 = vrot.slane %v694, %v733
        %v735 = vlaneseq
        %v736 = vshrl.u32 %v735, 7
        %v737 = vsub.s32 0, %v736
        %v738 = vrot.slane %v698, %v737
        %v739 = vmul.f32 %v420, %v710
        %v740 = vmul.f32 %v420, %v714
        %v741 = vmul.f32 %v420, %v718
        %v742 = vmul.f32 %v420, %v722
        %v743 = vmul.f32 %v420, %v726
        %v744 = vmul.f32 %v420, %v730
        %v745 = vmul.f32 %v420, %v734
        %v746 = vmul.f32 %v420, %v738
        %v747 = vmul.f32 %v426, %v710
        %v748 = vmul.f32 %v426, %v714
        %v749 = vmul.f32 %v426, %v718
        %v750 = vmul.f32 %v426, %v722
        %v751 = vmul.f32 %v426, %v726
        %v752 = vmul.f32 %v426, %v730
        %v753 = vmul.f32 %v426, %v734
        %v754 = vmul.f32 %v426, %v738
        %v755 = vmul.f32 %v432, %v710
        %v756 = vmul.f32 %v432, %v714
        %v757 = vmul.f32 %v432, %v718
        %v758 = vmul.f32 %v432, %v722
        %v759 = vmul.f32 %v432, %v726
        %v760 = vmul.f32 %v432, %v730
        %v761 = vmul.f32 %v432, %v734
        %v762 = vmul.f32 %v432, %v738
        %v763 = vmul.f32 %v438, %v710
        %v764 = vmul.f32 %v438, %v714
        %v765 = vmul.f32 %v438, %v718
        %v766 = vmul.f32 %v438, %v722
        %v767 = vmul.f32 %v438, %v726
        %v768 = vmul.f32 %v438, %v730
        %v769 = vmul.f32 %v438, %v734
        %v770 = vmul.f32 %v438, %v738
        %v771 = vmul.f32 %v444, %v710
        %v772 = vmul.f32 %v444, %v714
        %v773 = vmul.f32 %v444, %v718
        %v774 = vmul.f32 %v444, %v722
        %v775 = vmul.f32 %v444, %v726
        %v776 = vmul.f32 %v444, %v730
        %v777 = vmul.f32 %v444, %v734
        %v778 = vmul.f32 %v444, %v738
        %v779 = vmul.f32 %v450, %v710
        %v780 = vmul.f32 %v450, %v714
        %v781 = vmul.f32 %v450, %v718
        %v782 = vmul.f32 %v450, %v722
        %v783 = vmul.f32 %v450, %v726
        %v784 = vmul.f32 %v450, %v730
        %v785 = vmul.f32 %v450, %v734
        %v786 = vmul.f32 %v450, %v738
        %v787 = vmul.f32 %v456, %v710
        %v788 = vmul.f32 %v456, %v714
        %v789 = vmul.f32 %v456, %v718
        %v790 = vmul.f32 %v456, %v722
        %v791 = vmul.f32 %v456, %v726
        %v792 = vmul.f32 %v456, %v730
        %v793 = vmul.f32 %v456, %v734
        %v794 = vmul.f32 %v456, %v738
        %v795 = vmul.f32 %v462, %v710
        %v796 = vmul.f32 %v462, %v714
        %v797 = vmul.f32 %v462, %v718
        %v798 = vmul.f32 %v462, %v722
        %v799 = vmul.f32 %v462, %v726
        %v800 = vmul.f32 %v462, %v730
        %v801 = vmul.f32 %v462, %v734
        %v802 = vmul.f32 %v462, %v738
        %v803 = vmul.f32 %v468, %v710
        %v804 = vmul.f32 %v468, %v714
        %v805 = vmul.f32 %v468, %v718
        %v806 = vmul.f32 %v468, %v722
        %v807 = vmul.f32 %v468, %v726
        %v808 = vmul.f32 %v468, %v730
        %v809 = vmul.f32 %v468, %v734
        %v810 = vmul.f32 %v468, %v738
        %v811 = vmul.f32 %v474, %v710
        %v812 = vmul.f32 %v474, %v714
        %v813 = vmul.f32 %v474, %v718
        %v814 = vmul.f32 %v474, %v722
        %v815 = vmul.f32 %v474, %v726
        %v816 = vmul.f32 %v474, %v730
        %v817 = vmul.f32 %v474, %v734
        %v818 = vmul.f32 %v474, %v738
        %v819 = vmul.f32 %v480, %v710
        %v820 = vmul.f32 %v480, %v714
        %v821 = vmul.f32 %v480, %v718
        %v822 = vmul.f32 %v480, %v722
        %v823 = vmul.f32 %v480, %v726
        %v824 = vmul.f32 %v480, %v730
        %v825 = vmul.f32 %v480, %v734
        %v826 = vmul.f32 %v480, %v738
        %v827 = vmul.f32 %v486, %v710
        %v828 = vmul.f32 %v486, %v714
        %v829 = vmul.f32 %v486, %v718
        %v830 = vmul.f32 %v486, %v722
        %v831 = vmul.f32 %v486, %v726
        %v832 = vmul.f32 %v486, %v730
        %v833 = vmul.f32 %v486, %v734
        %v834 = vmul.f32 %v486, %v738
        %v835 = vmul.f32 %v492, %v710
        %v836 = vmul.f32 %v492, %v714
        %v837 = vmul.f32 %v492, %v718
        %v838 = vmul.f32 %v492, %v722
        %v839 = vmul.f32 %v492, %v726
        %v840 = vmul.f32 %v492, %v730
        %v841 = vmul.f32 %v492, %v734
        %v842 = vmul.f32 %v492, %v738
        %v843 = vmul.f32 %v498, %v710
        %v844 = vmul.f32 %v498, %v714
        %v845 = vmul.f32 %v498, %v718
        %v846 = vmul.f32 %v498, %v722
        %v847 = vmul.f32 %v498, %v726
        %v848 = vmul.f32 %v498, %v730
        %v849 = vmul.f32 %v498, %v734
        %v850 = vmul.f32 %v498, %v738
        %v851 = vmul.f32 %v504, %v710
        %v852 = vmul.f32 %v504, %v714
        %v853 = vmul.f32 %v504, %v718
        %v854 = vmul.f32 %v504, %v722
        %v855 = vmul.f32 %v504, %v726
        %v856 = vmul.f32 %v504, %v730
        %v857 = vmul.f32 %v504, %v734
        %v858 = vmul.f32 %v504, %v738
        %v859 = vmul.f32 %v510, %v710
        %v860 = vmul.f32 %v510, %v714
        %v861 = vmul.f32 %v510, %v718
        %v862 = vmul.f32 %v510, %v722
        %v863 = vmul.f32 %v510, %v726
        %v864 = vmul.f32 %v510, %v730
        %v865 = vmul.f32 %v510, %v734
        %v866 = vmul.f32 %v510, %v738
        %v867 = vlaneseq
        %v868 = vshrl.u32 %v867, 7
        %v869 = vsub.s32 1, %v868
        %v870 = vrot.slane %v659, %v869
        %v871 = vlaneseq
        %v872 = vshrl.u32 %v871, 7
        %v873 = vsub.s32 5, %v872
        %v874 = vrot.slane %v659, %v873
        %v875 = vlaneseq
        %v876 = vshrl.u32 %v875, 7
        %v877 = vsub.s32 1, %v876
        %v878 = vrot.slane %v660, %v877
        %v879 = vlaneseq
        %v880 = vshrl.u32 %v879, 7
        %v881 = vsub.s32 5, %v880
        %v882 = vrot.slane %v660, %v881
        %v883 = vlaneseq
        %v884 = vshrl.u32 %v883, 7
        %v885 = vsub.s32 1, %v884
        %v886 = vrot.slane %v661, %v885
        %v887 = vlaneseq
        %v888 = vshrl.u32 %v887, 7
        %v889 = vsub.s32 5, %v888
        %v890 = vrot.slane %v661, %v889
        %v891 = vlaneseq
        %v892 = vshrl.u32 %v891, 7
        %v893 = vsub.s32 1, %v892
        %v894 = vrot.slane %v662, %v893
        %v895 = vlaneseq
        %v896 = vshrl.u32 %v895, 7
        %v897 = vsub.s32 5, %v896
        %v898 = vrot.slane %v662, %v897
        %v907 = vlaneseq
        %v908 = vshrl.u32 %v907, 7
        %v909 = vsub.s32 1, %v908
        %v910 = vrot.slane %v870, %v909
        %v911 = vlaneseq
        %v912 = vshrl.u32 %v911, 7
        %v913 = vsub.s32 1, %v912
        %v914 = vrot.slane %v874, %v913
        %v915 = vlaneseq
        %v916 = vshrl.u32 %v915, 7
        %v917 = vsub.s32 1, %v916
        %v918 = vrot.slane %v878, %v917
        %v919 = vlaneseq
        %v920 = vshrl.u32 %v919, 7
        %v921 = vsub.s32 1, %v920
        %v922 = vrot.slane %v882, %v921
        %v923 = vlaneseq
        %v924 = vshrl.u32 %v923, 7
        %v925 = vsub.s32 1, %v924
        %v926 = vrot.slane %v886, %v925
        %v927 = vlaneseq
        %v928 = vshrl.u32 %v927, 7
        %v929 = vsub.s32 1, %v928
        %v930 = vrot.slane %v890, %v929
        %v931 = vlaneseq
        %v932 = vshrl.u32 %v931, 7
        %v933 = vsub.s32 1, %v932
        %v934 = vrot.slane %v894, %v933
        %v935 = vlaneseq
        %v936 = vshrl.u32 %v935, 7
        %v937 = vsub.s32 1, %v936
        %v938 = vrot.slane %v898, %v937
        %v939 = vmul.f32 %v422, %v910
        %v940 = vmul.f32 %v422, %v914
        %v941 = vmul.f32 %v422, %v918
        %v942 = vmul.f32 %v422, %v922
        %v943 = vmul.f32 %v422, %v926
        %v944 = vmul.f32 %v422, %v930
        %v945 = vmul.f32 %v422, %v934
        %v946 = vmul.f32 %v422, %v938
        %v947 = vmul.f32 %v428, %v910
        %v948 = vmul.f32 %v428, %v914
        %v949 = vmul.f32 %v428, %v918
        %v950 = vmul.f32 %v428, %v922
        %v951 = vmul.f32 %v428, %v926
        %v952 = vmul.f32 %v428, %v930
        %v953 = vmul.f32 %v428, %v934
        %v954 = vmul.f32 %v428, %v938
        %v955 = vmul.f32 %v434, %v910
        %v956 = vmul.f32 %v434, %v914
        %v957 = vmul.f32 %v434, %v918
        %v958 = vmul.f32 %v434, %v922
        %v959 = vmul.f32 %v434, %v926
        %v960 = vmul.f32 %v434, %v930
        %v961 = vmul.f32 %v434, %v934
        %v962 = vmul.f32 %v434, %v938
        %v963 = vmul.f32 %v440, %v910
        %v964 = vmul.f32 %v440, %v914
        %v965 = vmul.f32 %v440, %v918
        %v966 = vmul.f32 %v440, %v922
        %v967 = vmul.f32 %v440, %v926
        %v968 = vmul.f32 %v440, %v930
        %v969 = vmul.f32 %v440, %v934
        %v970 = vmul.f32 %v440, %v938
        %v971 = vmul.f32 %v446, %v910
        %v972 = vmul.f32 %v446, %v914
        %v973 = vmul.f32 %v446, %v918
        %v974 = vmul.f32 %v446, %v922
        %v975 = vmul.f32 %v446, %v926
        %v976 = vmul.f32 %v446, %v930
        %v977 = vmul.f32 %v446, %v934
        %v978 = vmul.f32 %v446, %v938
        %v979 = vmul.f32 %v452, %v910
        %v980 = vmul.f32 %v452, %v914
        %v981 = vmul.f32 %v452, %v918
        %v982 = vmul.f32 %v452, %v922
        %v983 = vmul.f32 %v452, %v926
        %v984 = vmul.f32 %v452, %v930
        %v985 = vmul.f32 %v452, %v934
        %v986 = vmul.f32 %v452, %v938
        %v987 = vmul.f32 %v458, %v910
        %v988 = vmul.f32 %v458, %v914
        %v989 = vmul.f32 %v458, %v918
        %v990 = vmul.f32 %v458, %v922
        %v991 = vmul.f32 %v458, %v926
        %v992 = vmul.f32 %v458, %v930
        %v993 = vmul.f32 %v458, %v934
        %v994 = vmul.f32 %v458, %v938
        %v995 = vmul.f32 %v464, %v910
        %v996 = vmul.f32 %v464, %v914
        %v997 = vmul.f32 %v464, %v918
        %v998 = vmul.f32 %v464, %v922
        %v999 = vmul.f32 %v464, %v926
        %v1000 = vmul.f32 %v464, %v930
        %v1001 = vmul.f32 %v464, %v934
        %v1002 = vmul.f32 %v464, %v938
        %v1003 = vmul.f32 %v470, %v910
        %v1004 = vmul.f32 %v470, %v914
        %v1005 = vmul.f32 %v470, %v918
        %v1006 = vmul.f32 %v470, %v922
        %v1007 = vmul.f32 %v470, %v926
        %v1008 = vmul.f32 %v470, %v930
        %v1009 = vmul.f32 %v470, %v934
        %v1010 = vmul.f32 %v470, %v938
        %v1011 = vmul.f32 %v476, %v910
        %v1012 = vmul.f32 %v476, %v914
        %v1013 = vmul.f32 %v476, %v918
        %v1014 = vmul.f32 %v476, %v922
        %v1015 = vmul.f32 %v476, %v926
        %v1016 = vmul.f32 %v476, %v930
        %v1017 = vmul.f32 %v476, %v934
        %v1018 = vmul.f32 %v476, %v938
        %v1019 = vmul.f32 %v482, %v910
        %v1020 = vmul.f32 %v482, %v914
        %v1021 = vmul.f32 %v482, %v918
        %v1022 = vmul.f32 %v482, %v922
        %v1023 = vmul.f32 %v482, %v926
        %v1024 = vmul.f32 %v482, %v930
        %v1025 = vmul.f32 %v482, %v934
        %v1026 = vmul.f32 %v482, %v938
        %v1027 = vmul.f32 %v488, %v910
        %v1028 = vmul.f32 %v488, %v914
        %v1029 = vmul.f32 %v488, %v918
        %v1030 = vmul.f32 %v488, %v922
        %v1031 = vmul.f32 %v488, %v926
        %v1032 = vmul.f32 %v488, %v930
        %v1033 = vmul.f32 %v488, %v934
        %v1034 = vmul.f32 %v488, %v938
        %v1035 = vmul.f32 %v494, %v910
        %v1036 = vmul.f32 %v494, %v914
        %v1037 = vmul.f32 %v494, %v918
        %v1038 = vmul.f32 %v494, %v922
        %v1039 = vmul.f32 %v494, %v926
        %v1040 = vmul.f32 %v494, %v930
        %v1041 = vmul.f32 %v494, %v934
        %v1042 = vmul.f32 %v494, %v938
        %v1043 = vmul.f32 %v500, %v910
        %v1044 = vmul.f32 %v500, %v914
        %v1045 = vmul.f32 %v500, %v918
        %v1046 = vmul.f32 %v500, %v922
        %v1047 = vmul.f32 %v500, %v926
        %v1048 = vmul.f32 %v500, %v930
        %v1049 = vmul.f32 %v500, %v934
        %v1050 = vmul.f32 %v500, %v938
        %v1051 = vmul.f32 %v506, %v910
        %v1052 = vmul.f32 %v506, %v914
        %v1053 = vmul.f32 %v506, %v918
        %v1054 = vmul.f32 %v506, %v922
        %v1055 = vmul.f32 %v506, %v926
        %v1056 = vmul.f32 %v506, %v930
        %v1057 = vmul.f32 %v506, %v934
        %v1058 = vmul.f32 %v506, %v938
        %v1059 = vmul.f32 %v512, %v910
        %v1060 = vmul.f32 %v512, %v914
        %v1061 = vmul.f32 %v512, %v918
        %v1062 = vmul.f32 %v512, %v922
        %v1063 = vmul.f32 %v512, %v926
        %v1064 = vmul.f32 %v512, %v930
        %v1065 = vmul.f32 %v512, %v934
        %v1066 = vmul.f32 %v512, %v938
        %v1067 = vadd.f32 %v739, %v939
        %v1068 = vadd.f32 %v740, %v940
        %v1069 = vadd.f32 %v741, %v941
        %v1070 = vadd.f32 %v742, %v942
        %v1071 = vadd.f32 %v743, %v943
        %v1072 = vadd.f32 %v744, %v944
        %v1073 = vadd.f32 %v745, %v945
        %v1074 = vadd.f32 %v746, %v946
        %v1075 = vadd.f32 %v747, %v947
        %v1076 = vadd.f32 %v748, %v948
        %v1077 = vadd.f32 %v749, %v949
        %v1078 = vadd.f32 %v750, %v950
        %v1079 = vadd.f32 %v751, %v951
        %v1080 = vadd.f32 %v752, %v952
        %v1081 = vadd.f32 %v753, %v953
        %v1082 = vadd.f32 %v754, %v954
        %v1083 = vadd.f32 %v755, %v955
        %v1084 = vadd.f32 %v756, %v956
        %v1085 = vadd.f32 %v757, %v957
        %v1086 = vadd.f32 %v758, %v958
        %v1087 = vadd.f32 %v759, %v959
        %v1088 = vadd.f32 %v760, %v960
        %v1089 = vadd.f32 %v761, %v961
        %v1090 = vadd.f32 %v762, %v962
        %v1091 = vadd.f32 %v763, %v963
        %v1092 = vadd.f32 %v764, %v964
        %v1093 = vadd.f32 %v765, %v965
        %v1094 = vadd.f32 %v766, %v966
        %v1095 = vadd.f32 %v767, %v967
        %v1096 = vadd.f32 %v768, %v968
        %v1097 = vadd.f32 %v769, %v969
        %v1098 = vadd.f32 %v770, %v970
        %v1099 = vadd.f32 %v771, %v971
        %v1100 = vadd.f32 %v772, %v972
        %v1101 = vadd.f32 %v773, %v973
        %v1102 = vadd.f32 %v774, %v974
        %v1103 = vadd.f32 %v775, %v975
        %v1104 = vadd.f32 %v776, %v976
        %v1105 = vadd.f32 %v777, %v977
        %v1106 = vadd.f32 %v778, %v978
        %v1107 = vadd.f32 %v779, %v979
        %v1108 = vadd.f32 %v780, %v980
        %v1109 = vadd.f32 %v781, %v981
        %v1110 = vadd.f32 %v782, %v982
        %v1111 = vadd.f32 %v783, %v983
        %v1112 = vadd.f32 %v784, %v984
        %v1113 = vadd.f32 %v785, %v985
        %v1114 = vadd.f32 %v786, %v986
        %v1115 = vadd.f32 %v787, %v987
        %v1116 = vadd.f32 %v788, %v988
        %v1117 = vadd.f32 %v789, %v989
        %v1118 = vadd.f32 %v790, %v990
        %v1119 = vadd.f32 %v791, %v991
        %v1120 = vadd.f32 %v792, %v992
        %v1121 = vadd.f32 %v793, %v993
        %v1122 = vadd.f32 %v794, %v994
        %v1123 = vadd.f32 %v795, %v995
        %v1124 = vadd.f32 %v796, %v996
        %v1125 = vadd.f32 %v797, %v997
        %v1126 = vadd.f32 %v798, %v998
        %v1127 = vadd.f32 %v799, %v999
        %v1128 = vadd.f32 %v800, %v1000
        %v1129 = vadd.f32 %v801, %v1001
        %v1130 = vadd.f32 %v802, %v1002
        %v1131 = vadd.f32 %v803, %v1003
        %v1132 = vadd.f32 %v804, %v1004
        %v1133 = vadd.f32 %v805, %v1005
        %v1134 = vadd.f32 %v806, %v1006
        %v1135 = vadd.f32 %v807, %v1007
        %v1136 = vadd.f32 %v808, %v1008
        %v1137 = vadd.f32 %v809, %v1009
        %v1138 = vadd.f32 %v810, %v1010
        %v1139 = vadd.f32 %v811, %v1011
        %v1140 = vadd.f32 %v812, %v1012
        %v1141 = vadd.f32 %v813, %v1013
        %v1142 = vadd.f32 %v814, %v1014
        %v1143 = vadd.f32 %v815, %v1015
        %v1144 = vadd.f32 %v816, %v1016
        %v1145 = vadd.f32 %v817, %v1017
        %v1146 = vadd.f32 %v818, %v1018
        %v1147 = vadd.f32 %v819, %v1019
        %v1148 = vadd.f32 %v820, %v1020
        %v1149 = vadd.f32 %v821, %v1021
        %v1150 = vadd.f32 %v822, %v1022
        %v1151 = vadd.f32 %v823, %v1023
        %v1152 = vadd.f32 %v824, %v1024
        %v1153 = vadd.f32 %v825, %v1025
        %v1154 = vadd.f32 %v826, %v1026
        %v1155 = vadd.f32 %v827, %v1027
        %v1156 = vadd.f32 %v828, %v1028
        %v1157 = vadd.f32 %v829, %v1029
        %v1158 = vadd.f32 %v830, %v1030
        %v1159 = vadd.f32 %v831, %v1031
        %v1160 = vadd.f32 %v832, %v1032
        %v1161 = vadd.f32 %v833, %v1033
        %v1162 = vadd.f32 %v834, %v1034
        %v1163 = vadd.f32 %v835, %v1035
        %v1164 = vadd.f32 %v836, %v1036
        %v1165 = vadd.f32 %v837, %v1037
        %v1166 = vadd.f32 %v838, %v1038
        %v1167 = vadd.f32 %v839, %v1039
        %v1168 = vadd.f32 %v840, %v1040
        %v1169 = vadd.f32 %v841, %v1041
        %v1170 = vadd.f32 %v842, %v1042
        %v1171 = vadd.f32 %v843, %v1043
        %v1172 = vadd.f32 %v844, %v1044
        %v1173 = vadd.f32 %v845, %v1045
        %v1174 = vadd.f32 %v846, %v1046
        %v1175 = vadd.f32 %v847, %v1047
        %v1176 = vadd.f32 %v848, %v1048
        %v1177 = vadd.f32 %v849, %v1049
        %v1178 = vadd.f32 %v850, %v1050
        %v1179 = vadd.f32 %v851, %v1051
        %v1180 = vadd.f32 %v852, %v1052
        %v1181 = vadd.f32 %v853, %v1053
        %v1182 = vadd.f32 %v854, %v1054
        %v1183 = vadd.f32 %v855, %v1055
        %v1184 = vadd.f32 %v856, %v1056
        %v1185 = vadd.f32 %v857, %v1057
        %v1186 = vadd.f32 %v858, %v1058
        %v1187 = vadd.f32 %v859, %v1059
        %v1188 = vadd.f32 %v860, %v1060
        %v1189 = vadd.f32 %v861, %v1061
        %v1190 = vadd.f32 %v862, %v1062
        %v1191 = vadd.f32 %v863, %v1063
        %v1192 = vadd.f32 %v864, %v1064
        %v1193 = vadd.f32 %v865, %v1065
        %v1194 = vadd.f32 %v866, %v1066
        %v1195 = vlaneseq
        %v1196 = vshrl.u32 %v1195, 7
        %v1197 = vsub.s32 2, %v1196
        %v1198 = vrot.slane %v659, %v1197
        %v1199 = vlaneseq
        %v1200 = vshrl.u32 %v1199, 7
        %v1201 = vsub.s32 6, %v1200
        %v1202 = vrot.slane %v659, %v1201
        %v1203 = vlaneseq
        %v1204 = vshrl.u32 %v1203, 7
        %v1205 = vsub.s32 2, %v1204
        %v1206 = vrot.slane %v660, %v1205
        %v1207 = vlaneseq
        %v1208 = vshrl.u32 %v1207, 7
        %v1209 = vsub.s32 6, %v1208
        %v1210 = vrot.slane %v660, %v1209
        %v1211 = vlaneseq
        %v1212 = vshrl.u32 %v1211, 7
        %v1213 = vsub.s32 2, %v1212
        %v1214 = vrot.slane %v661, %v1213
        %v1215 = vlaneseq
        %v1216 = vshrl.u32 %v1215, 7
        %v1217 = vsub.s32 6, %v1216
        %v1218 = vrot.slane %v661, %v1217
        %v1219 = vlaneseq
        %v1220 = vshrl.u32 %v1219, 7
        %v1221 = vsub.s32 2, %v1220
        %v1222 = vrot.slane %v662, %v1221
        %v1223 = vlaneseq
        %v1224 = vshrl.u32 %v1223, 7
        %v1225 = vsub.s32 6, %v1224
        %v1226 = vrot.slane %v662, %v1225
        %v1235 = vlaneseq
        %v1236 = vshrl.u32 %v1235, 7
        %v1237 = vsub.s32 2, %v1236
        %v1238 = vrot.slane %v1198, %v1237
        %v1239 = vlaneseq
        %v1240 = vshrl.u32 %v1239, 7
        %v1241 = vsub.s32 2, %v1240
        %v1242 = vrot.slane %v1202, %v1241
        %v1243 = vlaneseq
        %v1244 = vshrl.u32 %v1243, 7
        %v1245 = vsub.s32 2, %v1244
        %v1246 = vrot.slane %v1206, %v1245
        %v1247 = vlaneseq
        %v1248 = vshrl.u32 %v1247, 7
        %v1249 = vsub.s32 2, %v1248
        %v1250 = vrot.slane %v1210, %v1249
        %v1251 = vlaneseq
        %v1252 = vshrl.u32 %v1251, 7
        %v1253 = vsub.s32 2, %v1252
        %v1254 = vrot.slane %v1214, %v1253
        %v1255 = vlaneseq
        %v1256 = vshrl.u32 %v1255, 7
        %v1257 = vsub.s32 2, %v1256
        %v1258 = vrot.slane %v1218, %v1257
        %v1259 = vlaneseq
        %v1260 = vshrl.u32 %v1259, 7
        %v1261 = vsub.s32 2, %v1260
        %v1262 = vrot.slane %v1222, %v1261
        %v1263 = vlaneseq
        %v1264 = vshrl.u32 %v1263, 7
        %v1265 = vsub.s32 2, %v1264
        %v1266 = vrot.slane %v1226, %v1265
        %v1267 = vmul.f32 %v581, %v1238
        %v1268 = vmul.f32 %v581, %v1242
        %v1269 = vmul.f32 %v581, %v1246
        %v1270 = vmul.f32 %v581, %v1250
        %v1271 = vmul.f32 %v581, %v1254
        %v1272 = vmul.f32 %v581, %v1258
        %v1273 = vmul.f32 %v581, %v1262
        %v1274 = vmul.f32 %v581, %v1266
        %v1275 = vmul.f32 %v586, %v1238
        %v1276 = vmul.f32 %v586, %v1242
        %v1277 = vmul.f32 %v586, %v1246
        %v1278 = vmul.f32 %v586, %v1250
        %v1279 = vmul.f32 %v586, %v1254
        %v1280 = vmul.f32 %v586, %v1258
        %v1281 = vmul.f32 %v586, %v1262
        %v1282 = vmul.f32 %v586, %v1266
        %v1283 = vmul.f32 %v591, %v1238
        %v1284 = vmul.f32 %v591, %v1242
        %v1285 = vmul.f32 %v591, %v1246
        %v1286 = vmul.f32 %v591, %v1250
        %v1287 = vmul.f32 %v591, %v1254
        %v1288 = vmul.f32 %v591, %v1258
        %v1289 = vmul.f32 %v591, %v1262
        %v1290 = vmul.f32 %v591, %v1266
        %v1291 = vmul.f32 %v596, %v1238
        %v1292 = vmul.f32 %v596, %v1242
        %v1293 = vmul.f32 %v596, %v1246
        %v1294 = vmul.f32 %v596, %v1250
        %v1295 = vmul.f32 %v596, %v1254
        %v1296 = vmul.f32 %v596, %v1258
        %v1297 = vmul.f32 %v596, %v1262
        %v1298 = vmul.f32 %v596, %v1266
        %v1299 = vmul.f32 %v601, %v1238
        %v1300 = vmul.f32 %v601, %v1242
        %v1301 = vmul.f32 %v601, %v1246
        %v1302 = vmul.f32 %v601, %v1250
        %v1303 = vmul.f32 %v601, %v1254
        %v1304 = vmul.f32 %v601, %v1258
        %v1305 = vmul.f32 %v601, %v1262
        %v1306 = vmul.f32 %v601, %v1266
        %v1307 = vmul.f32 %v606, %v1238
        %v1308 = vmul.f32 %v606, %v1242
        %v1309 = vmul.f32 %v606, %v1246
        %v1310 = vmul.f32 %v606, %v1250
        %v1311 = vmul.f32 %v606, %v1254
        %v1312 = vmul.f32 %v606, %v1258
        %v1313 = vmul.f32 %v606, %v1262
        %v1314 = vmul.f32 %v606, %v1266
        %v1315 = vmul.f32 %v611, %v1238
        %v1316 = vmul.f32 %v611, %v1242
        %v1317 = vmul.f32 %v611, %v1246
        %v1318 = vmul.f32 %v611, %v1250
        %v1319 = vmul.f32 %v611, %v1254
        %v1320 = vmul.f32 %v611, %v1258
        %v1321 = vmul.f32 %v611, %v1262
        %v1322 = vmul.f32 %v611, %v1266
        %v1323 = vmul.f32 %v616, %v1238
        %v1324 = vmul.f32 %v616, %v1242
        %v1325 = vmul.f32 %v616, %v1246
        %v1326 = vmul.f32 %v616, %v1250
        %v1327 = vmul.f32 %v616, %v1254
        %v1328 = vmul.f32 %v616, %v1258
        %v1329 = vmul.f32 %v616, %v1262
        %v1330 = vmul.f32 %v616, %v1266
        %v1331 = vmul.f32 %v621, %v1238
        %v1332 = vmul.f32 %v621, %v1242
        %v1333 = vmul.f32 %v621, %v1246
        %v1334 = vmul.f32 %v621, %v1250
        %v1335 = vmul.f32 %v621, %v1254
        %v1336 = vmul.f32 %v621, %v1258
        %v1337 = vmul.f32 %v621, %v1262
        %v1338 = vmul.f32 %v621, %v1266
        %v1339 = vmul.f32 %v626, %v1238
        %v1340 = vmul.f32 %v626, %v1242
        %v1341 = vmul.f32 %v626, %v1246
        %v1342 = vmul.f32 %v626, %v1250
        %v1343 = vmul.f32 %v626, %v1254
        %v1344 = vmul.f32 %v626, %v1258
        %v1345 = vmul.f32 %v626, %v1262
        %v1346 = vmul.f32 %v626, %v1266
        %v1347 = vmul.f32 %v631, %v1238
        %v1348 = vmul.f32 %v631, %v1242
        %v1349 = vmul.f32 %v631, %v1246
        %v1350 = vmul.f32 %v631, %v1250
        %v1351 = vmul.f32 %v631, %v1254
        %v1352 = vmul.f32 %v631, %v1258
        %v1353 = vmul.f32 %v631, %v1262
        %v1354 = vmul.f32 %v631, %v1266
        %v1355 = vmul.f32 %v636, %v1238
        %v1356 = vmul.f32 %v636, %v1242
        %v1357 = vmul.f32 %v636, %v1246
        %v1358 = vmul.f32 %v636, %v1250
        %v1359 = vmul.f32 %v636, %v1254
        %v1360 = vmul.f32 %v636, %v1258
        %v1361 = vmul.f32 %v636, %v1262
        %v1362 = vmul.f32 %v636, %v1266
        %v1363 = vmul.f32 %v641, %v1238
        %v1364 = vmul.f32 %v641, %v1242
        %v1365 = vmul.f32 %v641, %v1246
        %v1366 = vmul.f32 %v641, %v1250
        %v1367 = vmul.f32 %v641, %v1254
        %v1368 = vmul.f32 %v641, %v1258
        %v1369 = vmul.f32 %v641, %v1262
        %v1370 = vmul.f32 %v641, %v1266
        %v1371 = vmul.f32 %v646, %v1238
        %v1372 = vmul.f32 %v646, %v1242
        %v1373 = vmul.f32 %v646, %v1246
        %v1374 = vmul.f32 %v646, %v1250
        %v1375 = vmul.f32 %v646, %v1254
        %v1376 = vmul.f32 %v646, %v1258
        %v1377 = vmul.f32 %v646, %v1262
        %v1378 = vmul.f32 %v646, %v1266
        %v1379 = vmul.f32 %v651, %v1238
        %v1380 = vmul.f32 %v651, %v1242
        %v1381 = vmul.f32 %v651, %v1246
        %v1382 = vmul.f32 %v651, %v1250
        %v1383 = vmul.f32 %v651, %v1254
        %v1384 = vmul.f32 %v651, %v1258
        %v1385 = vmul.f32 %v651, %v1262
        %v1386 = vmul.f32 %v651, %v1266
        %v1387 = vmul.f32 %v656, %v1238
        %v1388 = vmul.f32 %v656, %v1242
        %v1389 = vmul.f32 %v656, %v1246
        %v1390 = vmul.f32 %v656, %v1250
        %v1391 = vmul.f32 %v656, %v1254
        %v1392 = vmul.f32 %v656, %v1258
        %v1393 = vmul.f32 %v656, %v1262
        %v1394 = vmul.f32 %v656, %v1266
        %v1395 = vadd.f32 %v1067, %v1267
        %v1396 = vadd.f32 %v1068, %v1268
        %v1397 = vadd.f32 %v1069, %v1269
        %v1398 = vadd.f32 %v1070, %v1270
        %v1399 = vadd.f32 %v1071, %v1271
        %v1400 = vadd.f32 %v1072, %v1272
        %v1401 = vadd.f32 %v1073, %v1273
        %v1402 = vadd.f32 %v1074, %v1274
        %v1403 = vadd.f32 %v1075, %v1275
        %v1404 = vadd.f32 %v1076, %v1276
        %v1405 = vadd.f32 %v1077, %v1277
        %v1406 = vadd.f32 %v1078, %v1278
        %v1407 = vadd.f32 %v1079, %v1279
        %v1408 = vadd.f32 %v1080, %v1280
        %v1409 = vadd.f32 %v1081, %v1281
        %v1410 = vadd.f32 %v1082, %v1282
        %v1411 = vadd.f32 %v1083, %v1283
        %v1412 = vadd.f32 %v1084, %v1284
        %v1413 = vadd.f32 %v1085, %v1285
        %v1414 = vadd.f32 %v1086, %v1286
        %v1415 = vadd.f32 %v1087, %v1287
        %v1416 = vadd.f32 %v1088, %v1288
        %v1417 = vadd.f32 %v1089, %v1289
        %v1418 = vadd.f32 %v1090, %v1290
        %v1419 = vadd.f32 %v1091, %v1291
        %v1420 = vadd.f32 %v1092, %v1292
        %v1421 = vadd.f32 %v1093, %v1293
        %v1422 = vadd.f32 %v1094, %v1294
        %v1423 = vadd.f32 %v1095, %v1295
        %v1424 = vadd.f32 %v1096, %v1296
        %v1425 = vadd.f32 %v1097, %v1297
        %v1426 = vadd.f32 %v1098, %v1298
        %v1427 = vadd.f32 %v1099, %v1299
        %v1428 = vadd.f32 %v1100, %v1300
        %v1429 = vadd.f32 %v1101, %v1301
        %v1430 = vadd.f32 %v1102, %v1302
        %v1431 = vadd.f32 %v1103, %v1303
        %v1432 = vadd.f32 %v1104, %v1304
        %v1433 = vadd.f32 %v1105, %v1305
        %v1434 = vadd.f32 %v1106, %v1306
        %v1435 = vadd.f32 %v1107, %v1307
        %v1436 = vadd.f32 %v1108, %v1308
        %v1437 = vadd.f32 %v1109, %v1309
        %v1438 = vadd.f32 %v1110, %v1310
        %v1439 = vadd.f32 %v1111, %v1311
        %v1440 = vadd.f32 %v1112, %v1312
        %v1441 = vadd.f32 %v1113, %v1313
        %v1442 = vadd.f32 %v1114, %v1314
        %v1443 = vadd.f32 %v1115, %v1315
        %v1444 = vadd.f32 %v1116, %v1316
        %v1445 = vadd.f32 %v1117, %v1317
        %v1446 = vadd.f32 %v1118, %v1318
        %v1447 = vadd.f32 %v1119, %v1319
        %v1448 = vadd.f32 %v1120, %v1320
        %v1449 = vadd.f32 %v1121, %v1321
        %v1450 = vadd.f32 %v1122, %v1322
        %v1451 = vadd.f32 %v1123, %v1323
        %v1452 = vadd.f32 %v1124, %v1324
        %v1453 = vadd.f32 %v1125, %v1325
        %v1454 = vadd.f32 %v1126, %v1326
        %v1455 = vadd.f32 %v1127, %v1327
        %v1456 = vadd.f32 %v1128, %v1328
        %v1457 = vadd.f32 %v1129, %v1329
        %v1458 = vadd.f32 %v1130, %v1330
        %v1459 = vadd.f32 %v1131, %v1331
        %v1460 = vadd.f32 %v1132, %v1332
        %v1461 = vadd.f32 %v1133, %v1333
        %v1462 = vadd.f32 %v1134, %v1334
        %v1463 = vadd.f32 %v1135, %v1335
        %v1464 = vadd.f32 %v1136, %v1336
        %v1465 = vadd.f32 %v1137, %v1337
        %v1466 = vadd.f32 %v1138, %v1338
        %v1467 = vadd.f32 %v1139, %v1339
        %v1468 = vadd.f32 %v1140, %v1340
        %v1469 = vadd.f32 %v1141, %v1341
        %v1470 = vadd.f32 %v1142, %v1342
        %v1471 = vadd.f32 %v1143, %v1343
        %v1472 = vadd.f32 %v1144, %v1344
        %v1473 = vadd.f32 %v1145, %v1345
        %v1474 = vadd.f32 %v1146, %v1346
        %v1475 = vadd.f32 %v1147, %v1347
        %v1476 = vadd.f32 %v1148, %v1348
        %v1477 = vadd.f32 %v1149, %v1349
        %v1478 = vadd.f32 %v1150, %v1350
        %v1479 = vadd.f32 %v1151, %v1351
        %v1480 = vadd.f32 %v1152, %v1352
        %v1481 = vadd.f32 %v1153, %v1353
        %v1482 = vadd.f32 %v1154, %v1354
        %v1483 = vadd.f32 %v1155, %v1355
        %v1484 = vadd.f32 %v1156, %v1356
        %v1485 = vadd.f32 %v1157, %v1357
        %v1486 = vadd.f32 %v1158, %v1358
        %v1487 = vadd.f32 %v1159, %v1359
        %v1488 = vadd.f32 %v1160, %v1360
        %v1489 = vadd.f32 %v1161, %v1361
        %v1490 = vadd.f32 %v1162, %v1362
        %v1491 = vadd.f32 %v1163, %v1363
        %v1492 = vadd.f32 %v1164, %v1364
        %v1493 = vadd.f32 %v1165, %v1365
        %v1494 = vadd.f32 %v1166, %v1366
        %v1495 = vadd.f32 %v1167, %v1367
        %v1496 = vadd.f32 %v1168, %v1368
        %v1497 = vadd.f32 %v1169, %v1369
        %v1498 = vadd.f32 %v1170, %v1370
        %v1499 = vadd.f32 %v1171, %v1371
        %v1500 = vadd.f32 %v1172, %v1372
        %v1501 = vadd.f32 %v1173, %v1373
        %v1502 = vadd.f32 %v1174, %v1374
        %v1503 = vadd.f32 %v1175, %v1375
        %v1504 = vadd.f32 %v1176, %v1376
        %v1505 = vadd.f32 %v1177, %v1377
        %v1506 = vadd.f32 %v1178, %v1378
        %v1507 = vadd.f32 %v1179, %v1379
        %v1508 = vadd.f32 %v1180, %v1380
        %v1509 = vadd.f32 %v1181, %v1381
        %v1510 = vadd.f32 %v1182, %v1382
        %v1511 = vadd.f32 %v1183, %v1383
        %v1512 = vadd.f32 %v1184, %v1384
        %v1513 = vadd.f32 %v1185, %v1385
        %v1514 = vadd.f32 %v1186, %v1386
        %v1515 = vadd.f32 %v1187, %v1387
        %v1516 = vadd.f32 %v1188, %v1388
        %v1517 = vadd.f32 %v1189, %v1389
        %v1518 = vadd.f32 %v1190, %v1390
        %v1519 = vadd.f32 %v1191, %v1391
        %v1520 = vadd.f32 %v1192, %v1392
        %v1521 = vadd.f32 %v1193, %v1393
        %v1522 = vadd.f32 %v1194, %v1394
        %v1523 = vlaneseq
        %v1524 = vshrl.u32 %v1523, 7
        %v1525 = vsub.s32 3, %v1524
        %v1526 = vrot.slane %v659, %v1525
        %v1527 = vlaneseq
        %v1528 = vshrl.u32 %v1527, 7
        %v1529 = vsub.s32 7, %v1528
        %v1530 = vrot.slane %v659, %v1529
        %v1531 = vlaneseq
        %v1532 = vshrl.u32 %v1531, 7
        %v1533 = vsub.s32 3, %v1532
        %v1534 = vrot.slane %v660, %v1533
        %v1535 = vlaneseq
        %v1536 = vshrl.u32 %v1535, 7
        %v1537 = vsub.s32 7, %v1536
        %v1538 = vrot.slane %v660, %v1537
        %v1539 = vlaneseq
        %v1540 = vshrl.u32 %v1539, 7
        %v1541 = vsub.s32 3, %v1540
        %v1542 = vrot.slane %v661, %v1541
        %v1543 = vlaneseq
        %v1544 = vshrl.u32 %v1543, 7
        %v1545 = vsub.s32 7, %v1544
        %v1546 = vrot.slane %v661, %v1545
        %v1547 = vlaneseq
        %v1548 = vshrl.u32 %v1547, 7
        %v1549 = vsub.s32 3, %v1548
        %v1550 = vrot.slane %v662, %v1549
        %v1551 = vlaneseq
        %v1552 = vshrl.u32 %v1551, 7
        %v1553 = vsub.s32 7, %v1552
        %v1554 = vrot.slane %v662, %v1553
        %v1563 = vlaneseq
        %v1564 = vshrl.u32 %v1563, 7
        %v1565 = vsub.s32 3, %v1564
        %v1566 = vrot.slane %v1526, %v1565
        %v1567 = vlaneseq
        %v1568 = vshrl.u32 %v1567, 7
        %v1569 = vsub.s32 3, %v1568
        %v1570 = vrot.slane %v1530, %v1569
        %v1571 = vlaneseq
        %v1572 = vshrl.u32 %v1571, 7
        %v1573 = vsub.s32 3, %v1572
        %v1574 = vrot.slane %v1534, %v1573
        %v1575 = vlaneseq
        %v1576 = vshrl.u32 %v1575, 7
        %v1577 = vsub.s32 3, %v1576
        %v1578 = vrot.slane %v1538, %v1577
        %v1579 = vlaneseq
        %v1580 = vshrl.u32 %v1579, 7
        %v1581 = vsub.s32 3, %v1580
        %v1582 = vrot.slane %v1542, %v1581
        %v1583 = vlaneseq
        %v1584 = vshrl.u32 %v1583, 7
        %v1585 = vsub.s32 3, %v1584
        %v1586 = vrot.slane %v1546, %v1585
        %v1587 = vlaneseq
        %v1588 = vshrl.u32 %v1587, 7
        %v1589 = vsub.s32 3, %v1588
        %v1590 = vrot.slane %v1550, %v1589
        %v1591 = vlaneseq
        %v1592 = vshrl.u32 %v1591, 7
        %v1593 = vsub.s32 3, %v1592
        %v1594 = vrot.slane %v1554, %v1593
        %v1595 = vadd.f32 %v1395, %v1566
        %v1596 = vadd.f32 %v1396, %v1570
        %v1597 = vadd.f32 %v1397, %v1574
        %v1598 = vadd.f32 %v1398, %v1578
        %v1599 = vadd.f32 %v1399, %v1582
        %v1600 = vadd.f32 %v1400, %v1586
        %v1601 = vadd.f32 %v1401, %v1590
        %v1602 = vadd.f32 %v1402, %v1594
        %v1603 = vadd.f32 %v1403, %v1566
        %v1604 = vadd.f32 %v1404, %v1570
        %v1605 = vadd.f32 %v1405, %v1574
        %v1606 = vadd.f32 %v1406, %v1578
        %v1607 = vadd.f32 %v1407, %v1582
        %v1608 = vadd.f32 %v1408, %v1586
        %v1609 = vadd.f32 %v1409, %v1590
        %v1610 = vadd.f32 %v1410, %v1594
        %v1611 = vadd.f32 %v1411, %v1566
        %v1612 = vadd.f32 %v1412, %v1570
        %v1613 = vadd.f32 %v1413, %v1574
        %v1614 = vadd.f32 %v1414, %v1578
        %v1615 = vadd.f32 %v1415, %v1582
        %v1616 = vadd.f32 %v1416, %v1586
        %v1617 = vadd.f32 %v1417, %v1590
        %v1618 = vadd.f32 %v1418, %v1594
        %v1619 = vadd.f32 %v1419, %v1566
        %v1620 = vadd.f32 %v1420, %v1570
        %v1621 = vadd.f32 %v1421, %v1574
        %v1622 = vadd.f32 %v1422, %v1578
        %v1623 = vadd.f32 %v1423, %v1582
        %v1624 = vadd.f32 %v1424, %v1586
        %v1625 = vadd.f32 %v1425, %v1590
        %v1626 = vadd.f32 %v1426, %v1594
        %v1627 = vadd.f32 %v1427, %v1566
        %v1628 = vadd.f32 %v1428, %v1570
        %v1629 = vadd.f32 %v1429, %v1574
        %v1630 = vadd.f32 %v1430, %v1578
        %v1631 = vadd.f32 %v1431, %v1582
        %v1632 = vadd.f32 %v1432, %v1586
        %v1633 = vadd.f32 %v1433, %v1590
        %v1634 = vadd.f32 %v1434, %v1594
        %v1635 = vadd.f32 %v1435, %v1566
        %v1636 = vadd.f32 %v1436, %v1570
        %v1637 = vadd.f32 %v1437, %v1574
        %v1638 = vadd.f32 %v1438, %v1578
        %v1639 = vadd.f32 %v1439, %v1582
        %v1640 = vadd.f32 %v1440, %v1586
        %v1641 = vadd.f32 %v1441, %v1590
        %v1642 = vadd.f32 %v1442, %v1594
        %v1643 = vadd.f32 %v1443, %v1566
        %v1644 = vadd.f32 %v1444, %v1570
        %v1645 = vadd.f32 %v1445, %v1574
        %v1646 = vadd.f32 %v1446, %v1578
        %v1647 = vadd.f32 %v1447, %v1582
        %v1648 = vadd.f32 %v1448, %v1586
        %v1649 = vadd.f32 %v1449, %v1590
        %v1650 = vadd.f32 %v1450, %v1594
        %v1651 = vadd.f32 %v1451, %v1566
        %v1652 = vadd.f32 %v1452, %v1570
        %v1653 = vadd.f32 %v1453, %v1574
        %v1654 = vadd.f32 %v1454, %v1578
        %v1655 = vadd.f32 %v1455, %v1582
        %v1656 = vadd.f32 %v1456, %v1586
        %v1657 = vadd.f32 %v1457, %v1590
        %v1658 = vadd.f32 %v1458, %v1594
        %v1659 = vadd.f32 %v1459, %v1566
        %v1660 = vadd.f32 %v1460, %v1570
        %v1661 = vadd.f32 %v1461, %v1574
        %v1662 = vadd.f32 %v1462, %v1578
        %v1663 = vadd.f32 %v1463, %v1582
        %v1664 = vadd.f32 %v1464, %v1586
        %v1665 = vadd.f32 %v1465, %v1590
        %v1666 = vadd.f32 %v1466, %v1594
        %v1667 = vadd.f32 %v1467, %v1566
        %v1668 = vadd.f32 %v1468, %v1570
        %v1669 = vadd.f32 %v1469, %v1574
        %v1670 = vadd.f32 %v1470, %v1578
        %v1671 = vadd.f32 %v1471, %v1582
        %v1672 = vadd.f32 %v1472, %v1586
        %v1673 = vadd.f32 %v1473, %v1590
        %v1674 = vadd.f32 %v1474, %v1594
        %v1675 = vadd.f32 %v1475, %v1566
        %v1676 = vadd.f32 %v1476, %v1570
        %v1677 = vadd.f32 %v1477, %v1574
        %v1678 = vadd.f32 %v1478, %v1578
        %v1679 = vadd.f32 %v1479, %v1582
        %v1680 = vadd.f32 %v1480, %v1586
        %v1681 = vadd.f32 %v1481, %v1590
        %v1682 = vadd.f32 %v1482, %v1594
        %v1683 = vadd.f32 %v1483, %v1566
        %v1684 = vadd.f32 %v1484, %v1570
        %v1685 = vadd.f32 %v1485, %v1574
        %v1686 = vadd.f32 %v1486, %v1578
        %v1687 = vadd.f32 %v1487, %v1582
        %v1688 = vadd.f32 %v1488, %v1586
        %v1689 = vadd.f32 %v1489, %v1590
        %v1690 = vadd.f32 %v1490, %v1594
        %v1691 = vadd.f32 %v1491, %v1566
        %v1692 = vadd.f32 %v1492, %v1570
        %v1693 = vadd.f32 %v1493, %v1574
        %v1694 = vadd.f32 %v1494, %v1578
        %v1695 = vadd.f32 %v1495, %v1582
        %v1696 = vadd.f32 %v1496, %v1586
        %v1697 = vadd.f32 %v1497, %v1590
        %v1698 = vadd.f32 %v1498, %v1594
        %v1699 = vadd.f32 %v1499, %v1566
        %v1700 = vadd.f32 %v1500, %v1570
        %v1701 = vadd.f32 %v1501, %v1574
        %v1702 = vadd.f32 %v1502, %v1578
        %v1703 = vadd.f32 %v1503, %v1582
        %v1704 = vadd.f32 %v1504, %v1586
        %v1705 = vadd.f32 %v1505, %v1590
        %v1706 = vadd.f32 %v1506, %v1594
        %v1707 = vadd.f32 %v1507, %v1566
        %v1708 = vadd.f32 %v1508, %v1570
        %v1709 = vadd.f32 %v1509, %v1574
        %v1710 = vadd.f32 %v1510, %v1578
        %v1711 = vadd.f32 %v1511, %v1582
        %v1712 = vadd.f32 %v1512, %v1586
        %v1713 = vadd.f32 %v1513, %v1590
        %v1714 = vadd.f32 %v1514, %v1594
        %v1715 = vadd.f32 %v1515, %v1566
        %v1716 = vadd.f32 %v1516, %v1570
        %v1717 = vadd.f32 %v1517, %v1574
        %v1718 = vadd.f32 %v1518, %v1578
        %v1719 = vadd.f32 %v1519, %v1582
        %v1720 = vadd.f32 %v1520, %v1586
        %v1721 = vadd.f32 %v1521, %v1590
        %v1722 = vadd.f32 %v1522, %v1594
        %v1723 = vmax.f32 %v1595, 0.0
        %v1724 = vmax.f32 %v1596, 0.0
        %v1725 = vmax.f32 %v1597, 0.0
        %v1726 = vmax.f32 %v1598, 0.0
        %v1727 = vmax.f32 %v1599, 0.0
        %v1728 = vmax.f32 %v1600, 0.0
        %v1729 = vmax.f32 %v1601, 0.0
        %v1730 = vmax.f32 %v1602, 0.0
        %v1731 = vmax.f32 %v1603, 0.0
        %v1732 = vmax.f32 %v1604, 0.0
        %v1733 = vmax.f32 %v1605, 0.0
        %v1734 = vmax.f32 %v1606, 0.0
        %v1735 = vmax.f32 %v1607, 0.0
        %v1736 = vmax.f32 %v1608, 0.0
        %v1737 = vmax.f32 %v1609, 0.0
        %v1738 = vmax.f32 %v1610, 0.0
        %v1739 = vmax.f32 %v1611, 0.0
        %v1740 = vmax.f32 %v1612, 0.0
        %v1741 = vmax.f32 %v1613, 0.0
        %v1742 = vmax.f32 %v1614, 0.0
        %v1743 = vmax.f32 %v1615, 0.0
        %v1744 = vmax.f32 %v1616, 0.0
        %v1745 = vmax.f32 %v1617, 0.0
        %v1746 = vmax.f32 %v1618, 0.0
        %v1747 = vmax.f32 %v1619, 0.0
        %v1748 = vmax.f32 %v1620, 0.0
        %v1749 = vmax.f32 %v1621, 0.0
        %v1750 = vmax.f32 %v1622, 0.0
        %v1751 = vmax.f32 %v1623, 0.0
        %v1752 = vmax.f32 %v1624, 0.0
        %v1753 = vmax.f32 %v1625, 0.0
        %v1754 = vmax.f32 %v1626, 0.0
        %v1755 = vmax.f32 %v1627, 0.0
        %v1756 = vmax.f32 %v1628, 0.0
        %v1757 = vmax.f32 %v1629, 0.0
        %v1758 = vmax.f32 %v1630, 0.0
        %v1759 = vmax.f32 %v1631, 0.0
        %v1760 = vmax.f32 %v1632, 0.0
        %v1761 = vmax.f32 %v1633, 0.0
        %v1762 = vmax.f32 %v1634, 0.0
        %v1763 = vmax.f32 %v1635, 0.0
        %v1764 = vmax.f32 %v1636, 0.0
        %v1765 = vmax.f32 %v1637, 0.0
        %v1766 = vmax.f32 %v1638, 0.0
        %v1767 = vmax.f32 %v1639, 0.0
        %v1768 = vmax.f32 %v1640, 0.0
        %v1769 = vmax.f32 %v1641, 0.0
        %v1770 = vmax.f32 %v1642, 0.0
        %v1771 = vmax.f32 %v1643, 0.0
        %v1772 = vmax.f32 %v1644, 0.0
        %v1773 = vmax.f32 %v1645, 0.0
        %v1774 = vmax.f32 %v1646, 0.0
        %v1775 = vmax.f32 %v1647, 0.0
        %v1776 = vmax.f32 %v1648, 0.0
        %v1777 = vmax.f32 %v1649, 0.0
        %v1778 = vmax.f32 %v1650, 0.0
        %v1779 = vmax.f32 %v1651, 0.0
        %v1780 = vmax.f32 %v1652, 0.0
        %v1781 = vmax.f32 %v1653, 0.0
        %v1782 = vmax.f32 %v1654, 0.0
        %v1783 = vmax.f32 %v1655, 0.0
        %v1784 = vmax.f32 %v1656, 0.0
        %v1785 = vmax.f32 %v1657, 0.0
        %v1786 = vmax.f32 %v1658, 0.0
        %v1787 = vmax.f32 %v1659, 0.0
        %v1788 = vmax.f32 %v1660, 0.0
        %v1789 = vmax.f32 %v1661, 0.0
        %v1790 = vmax.f32 %v1662, 0.0
        %v1791 = vmax.f32 %v1663, 0.0
        %v1792 = vmax.f32 %v1664, 0.0
        %v1793 = vmax.f32 %v1665, 0.0
        %v1794 = vmax.f32 %v1666, 0.0
        %v1795 = vmax.f32 %v1667, 0.0
        %v1796 = vmax.f32 %v1668, 0.0
        %v1797 = vmax.f32 %v1669, 0.0
        %v1798 = vmax.f32 %v1670, 0.0
        %v1799 = vmax.f32 %v1671, 0.0
        %v1800 = vmax.f32 %v1672, 0.0
        %v1801 = vmax.f32 %v1673, 0.0
        %v1802 = vmax.f32 %v1674, 0.0
        %v1803 = vmax.f32 %v1675, 0.0
        %v1804 = vmax.f32 %v1676, 0.0
        %v1805 = vmax.f32 %v1677, 0.0
        %v1806 = vmax.f32 %v1678, 0.0
        %v1807 = vmax.f32 %v1679, 0.0
        %v1808 = vmax.f32 %v1680, 0.0
        %v1809 = vmax.f32 %v1681, 0.0
        %v1810 = vmax.f32 %v1682, 0.0
        %v1811 = vmax.f32 %v1683, 0.0
        %v1812 = vmax.f32 %v1684, 0.0
        %v1813 = vmax.f32 %v1685, 0.0
        %v1814 = vmax.f32 %v1686, 0.0
        %v1815 = vmax.f32 %v1687, 0.0
        %v1816 = vmax.f32 %v1688, 0.0
        %v1817 = vmax.f32 %v1689, 0.0
        %v1818 = vmax.f32 %v1690, 0.0
        %v1819 = vmax.f32 %v1691, 0.0
        %v1820 = vmax.f32 %v1692, 0.0
        %v1821 = vmax.f32 %v1693, 0.0
        %v1822 = vmax.f32 %v1694, 0.0
        %v1823 = vmax.f32 %v1695, 0.0
        %v1824 = vmax.f32 %v1696, 0.0
        %v1825 = vmax.f32 %v1697, 0.0
        %v1826 = vmax.f32 %v1698, 0.0
        %v1827 = vmax.f32 %v1699, 0.0
        %v1828 = vmax.f32 %v1700, 0.0
        %v1829 = vmax.f32 %v1701, 0.0
        %v1830 = vmax.f32 %v1702, 0.0
        %v1831 = vmax.f32 %v1703, 0.0
        %v1832 = vmax.f32 %v1704, 0.0
        %v1833 = vmax.f32 %v1705, 0.0
        %v1834 = vmax.f32 %v1706, 0.0
        %v1835 = vmax.f32 %v1707, 0.0
        %v1836 = vmax.f32 %v1708, 0.0
        %v1837 = vmax.f32 %v1709, 0.0
        %v1838 = vmax.f32 %v1710, 0.0
        %v1839 = vmax.f32 %v1711, 0.0
        %v1840 = vmax.f32 %v1712, 0.0
        %v1841 = vmax.f32 %v1713, 0.0
        %v1842 = vmax.f32 %v1714, 0.0
        %v1843 = vmax.f32 %v1715, 0.0
        %v1844 = vmax.f32 %v1716, 0.0
        %v1845 = vmax.f32 %v1717, 0.0
        %v1846 = vmax.f32 %v1718, 0.0
        %v1847 = vmax.f32 %v1719, 0.0
        %v1848 = vmax.f32 %v1720, 0.0
        %v1849 = vmax.f32 %v1721, 0.0
        %v1850 = vmax.f32 %v1722, 0.0
        %v1851 = vld [vmem:[#allocation7] sm:$0xff]
        %v1852 = vld [vmem:[#allocation7 + $0x8] sm:$0xff]
        %v1853 = vld [vmem:[#allocation7 + $0x10] sm:$0xff]
        %v1854 = vld [vmem:[#allocation7 + $0x18] sm:$0xff]
        %v1855 = vld [vmem:[#allocation7 + $0x20] sm:$0xff]
        %v1856 = vld [vmem:[#allocation7 + $0x28] sm:$0xff]
        %v1857 = vld [vmem:[#allocation7 + $0x30] sm:$0xff]
        %v1858 = vld [vmem:[#allocation7 + $0x38] sm:$0xff]
        %v1859 = vld [vmem:[#allocation7 + $0x40] sm:$0xff]
        %v1860 = vld [vmem:[#allocation7 + $0x48] sm:$0xff]
        %v1861 = vld [vmem:[#allocation7 + $0x50] sm:$0xff]
        %v1862 = vld [vmem:[#allocation7 + $0x58] sm:$0xff]
        %v1863 = vld [vmem:[#allocation7 + $0x60] sm:$0xff]
        %v1864 = vld [vmem:[#allocation7 + $0x68] sm:$0xff]
        %v1865 = vld [vmem:[#allocation7 + $0x70] sm:$0xff]
        %v1866 = vld [vmem:[#allocation7 + $0x78] sm:$0xff]
        %v1867 = vld [vmem:[#allocation7 + $0x80] sm:$0xff]
        %v1868 = vld [vmem:[#allocation7 + $0x88] sm:$0xff]
        %v1869 = vld [vmem:[#allocation7 + $0x90] sm:$0xff]
        %v1870 = vld [vmem:[#allocation7 + $0x98] sm:$0xff]
        %v1871 = vld [vmem:[#allocation7 + $0xa0] sm:$0xff]
        %v1872 = vld [vmem:[#allocation7 + $0xa8] sm:$0xff]
        %v1873 = vld [vmem:[#allocation7 + $0xb0] sm:$0xff]
        %v1874 = vld [vmem:[#allocation7 + $0xb8] sm:$0xff]
        %v1875 = vld [vmem:[#allocation7 + $0xc0] sm:$0xff]
        %v1876 = vld [vmem:[#allocation7 + $0xc8] sm:$0xff]
        %v1877 = vld [vmem:[#allocation7 + $0xd0] sm:$0xff]
        %v1878 = vld [vmem:[#allocation7 + $0xd8] sm:$0xff]
        %v1879 = vld [vmem:[#allocation7 + $0xe0] sm:$0xff]
        %v1880 = vld [vmem:[#allocation7 + $0xe8] sm:$0xff]
        %v1881 = vld [vmem:[#allocation7 + $0xf0] sm:$0xff]
        %v1882 = vld [vmem:[#allocation7 + $0xf8] sm:$0xff]
        %v1883 = vld [vmem:[#allocation7 + $0x100] sm:$0xff]
        %v1884 = vld [vmem:[#allocation7 + $0x108] sm:$0xff]
        %v1885 = vld [vmem:[#allocation7 + $0x110] sm:$0xff]
        %v1886 = vld [vmem:[#allocation7 + $0x118] sm:$0xff]
        %v1887 = vld [vmem:[#allocation7 + $0x120] sm:$0xff]
        %v1888 = vld [vmem:[#allocation7 + $0x128] sm:$0xff]
        %v1889 = vld [vmem:[#allocation7 + $0x130] sm:$0xff]
        %v1890 = vld [vmem:[#allocation7 + $0x138] sm:$0xff]
        %v1891 = vld [vmem:[#allocation7 + $0x140] sm:$0xff]
        %v1892 = vld [vmem:[#allocation7 + $0x148] sm:$0xff]
        %v1893 = vld [vmem:[#allocation7 + $0x150] sm:$0xff]
        %v1894 = vld [vmem:[#allocation7 + $0x158] sm:$0xff]
        %v1895 = vld [vmem:[#allocation7 + $0x160] sm:$0xff]
        %v1896 = vld [vmem:[#allocation7 + $0x168] sm:$0xff]
        %v1897 = vld [vmem:[#allocation7 + $0x170] sm:$0xff]
        %v1898 = vld [vmem:[#allocation7 + $0x178] sm:$0xff]
        %v1899 = vld [vmem:[#allocation7 + $0x180] sm:$0xff]
        %v1900 = vld [vmem:[#allocation7 + $0x188] sm:$0xff]
        %v1901 = vld [vmem:[#allocation7 + $0x190] sm:$0xff]
        %v1902 = vld [vmem:[#allocation7 + $0x198] sm:$0xff]
        %v1903 = vld [vmem:[#allocation7 + $0x1a0] sm:$0xff]
        %v1904 = vld [vmem:[#allocation7 + $0x1a8] sm:$0xff]
        %v1905 = vld [vmem:[#allocation7 + $0x1b0] sm:$0xff]
        %v1906 = vld [vmem:[#allocation7 + $0x1b8] sm:$0xff]
        %v1907 = vld [vmem:[#allocation7 + $0x1c0] sm:$0xff]
        %v1908 = vld [vmem:[#allocation7 + $0x1c8] sm:$0xff]
        %v1909 = vld [vmem:[#allocation7 + $0x1d0] sm:$0xff]
        %v1910 = vld [vmem:[#allocation7 + $0x1d8] sm:$0xff]
        %v1911 = vld [vmem:[#allocation7 + $0x1e0] sm:$0xff]
        %v1912 = vld [vmem:[#allocation7 + $0x1e8] sm:$0xff]
        %v1913 = vld [vmem:[#allocation7 + $0x1f0] sm:$0xff]
        %v1914 = vld [vmem:[#allocation7 + $0x1f8] sm:$0xff]
        %v1915 = vld [vmem:[#allocation7 + $0x200] sm:$0xff]
        %v1916 = vld [vmem:[#allocation7 + $0x208] sm:$0xff]
        %v1917 = vld [vmem:[#allocation7 + $0x210] sm:$0xff]
        %v1918 = vld [vmem:[#allocation7 + $0x218] sm:$0xff]
        %v1919 = vld [vmem:[#allocation7 + $0x220] sm:$0xff]
        %v1920 = vld [vmem:[#allocation7 + $0x228] sm:$0xff]
        %v1921 = vld [vmem:[#allocation7 + $0x230] sm:$0xff]
        %v1922 = vld [vmem:[#allocation7 + $0x238] sm:$0xff]
        %v1923 = vld [vmem:[#allocation7 + $0x240] sm:$0xff]
        %v1924 = vld [vmem:[#allocation7 + $0x248] sm:$0xff]
        %v1925 = vld [vmem:[#allocation7 + $0x250] sm:$0xff]
        %v1926 = vld [vmem:[#allocation7 + $0x258] sm:$0xff]
        %v1927 = vld [vmem:[#allocation7 + $0x260] sm:$0xff]
        %v1928 = vld [vmem:[#allocation7 + $0x268] sm:$0xff]
        %v1929 = vld [vmem:[#allocation7 + $0x270] sm:$0xff]
        %v1930 = vld [vmem:[#allocation7 + $0x278] sm:$0xff]
        %v1931 = vld [vmem:[#allocation7 + $0x280] sm:$0xff]
        %v1932 = vld [vmem:[#allocation7 + $0x288] sm:$0xff]
        %v1933 = vld [vmem:[#allocation7 + $0x290] sm:$0xff]
        %v1934 = vld [vmem:[#allocation7 + $0x298] sm:$0xff]
        %v1935 = vld [vmem:[#allocation7 + $0x2a0] sm:$0xff]
        %v1936 = vld [vmem:[#allocation7 + $0x2a8] sm:$0xff]
        %v1937 = vld [vmem:[#allocation7 + $0x2b0] sm:$0xff]
        %v1938 = vld [vmem:[#allocation7 + $0x2b8] sm:$0xff]
        %v1939 = vld [vmem:[#allocation7 + $0x2c0] sm:$0xff]
        %v1940 = vld [vmem:[#allocation7 + $0x2c8] sm:$0xff]
        %v1941 = vld [vmem:[#allocation7 + $0x2d0] sm:$0xff]
        %v1942 = vld [vmem:[#allocation7 + $0x2d8] sm:$0xff]
        %v1943 = vld [vmem:[#allocation7 + $0x2e0] sm:$0xff]
        %v1944 = vld [vmem:[#allocation7 + $0x2e8] sm:$0xff]
        %v1945 = vld [vmem:[#allocation7 + $0x2f0] sm:$0xff]
        %v1946 = vld [vmem:[#allocation7 + $0x2f8] sm:$0xff]
        %v1947 = vld [vmem:[#allocation7 + $0x300] sm:$0xff]
        %v1948 = vld [vmem:[#allocation7 + $0x308] sm:$0xff]
        %v1949 = vld [vmem:[#allocation7 + $0x310] sm:$0xff]
        %v1950 = vld [vmem:[#allocation7 + $0x318] sm:$0xff]
        %v1951 = vld [vmem:[#allocation7 + $0x320] sm:$0xff]
        %v1952 = vld [vmem:[#allocation7 + $0x328] sm:$0xff]
        %v1953 = vld [vmem:[#allocation7 + $0x330] sm:$0xff]
        %v1954 = vld [vmem:[#allocation7 + $0x338] sm:$0xff]
        %v1955 = vld [vmem:[#allocation7 + $0x340] sm:$0xff]
        %v1956 = vld [vmem:[#allocation7 + $0x348] sm:$0xff]
        %v1957 = vld [vmem:[#allocation7 + $0x350] sm:$0xff]
        %v1958 = vld [vmem:[#allocation7 + $0x358] sm:$0xff]
        %v1959 = vld [vmem:[#allocation7 + $0x360] sm:$0xff]
        %v1960 = vld [vmem:[#allocation7 + $0x368] sm:$0xff]
        %v1961 = vld [vmem:[#allocation7 + $0x370] sm:$0xff]
        %v1962 = vld [vmem:[#allocation7 + $0x378] sm:$0xff]
        %v1963 = vld [vmem:[#allocation7 + $0x380] sm:$0xff]
        %v1964 = vld [vmem:[#allocation7 + $0x388] sm:$0xff]
        %v1965 = vld [vmem:[#allocation7 + $0x390] sm:$0xff]
        %v1966 = vld [vmem:[#allocation7 + $0x398] sm:$0xff]
        %v1967 = vld [vmem:[#allocation7 + $0x3a0] sm:$0xff]
        %v1968 = vld [vmem:[#allocation7 + $0x3a8] sm:$0xff]
        %v1969 = vld [vmem:[#allocation7 + $0x3b0] sm:$0xff]
        %v1970 = vld [vmem:[#allocation7 + $0x3b8] sm:$0xff]
        %v1971 = vld [vmem:[#allocation7 + $0x3c0] sm:$0xff]
        %v1972 = vld [vmem:[#allocation7 + $0x3c8] sm:$0xff]
        %v1973 = vld [vmem:[#allocation7 + $0x3d0] sm:$0xff]
        %v1974 = vld [vmem:[#allocation7 + $0x3d8] sm:$0xff]
        %v1975 = vld [vmem:[#allocation7 + $0x3e0] sm:$0xff]
        %v1976 = vld [vmem:[#allocation7 + $0x3e8] sm:$0xff]
        %v1977 = vld [vmem:[#allocation7 + $0x3f0] sm:$0xff]
        %v1978 = vld [vmem:[#allocation7 + $0x3f8] sm:$0xff]
        %v1979 = vld [vmem:[%s4] sm:$0x1]
        %v1981 = vlaneseq
        %v1982 = vshrl.u32 %v1981, 7
        %v1983 = vsub.s32 0, %v1982
        %v1984 = vrot.slane %v1979, %v1983
        %1986 = vmatprep.subr.mxu0 0.0
        %1987 = vmatpush1.msra.mxu0 %v1851
        %1988 = vmatprep.subr.mxu0 0.0
        %1989 = vmatpush1.msra.mxu0 %v1852
        %1990 = vmatprep.subr.mxu0 0.0
        %1991 = vmatpush1.msra.mxu0 %v1853
        %1992 = vmatprep.subr.mxu0 0.0
        %1993 = vmatpush1.msra.mxu0 %v1854
        %1994 = vmatprep.subr.mxu0 0.0
        %1995 = vmatpush1.msra.mxu0 %v1855
        %1996 = vmatprep.subr.mxu0 0.0
        %1997 = vmatpush1.msra.mxu0 %v1856
        %1998 = vmatprep.subr.mxu0 0.0
        %1999 = vmatpush1.msra.mxu0 %v1857
        %2000 = vmatprep.subr.mxu0 0.0
        %2001 = vmatpush1.msra.mxu0 %v1858
        %2002 = vmatprep.subr.mxu0 0.0
        %2003 = vmatpush1.msra.mxu0 %v1859
        %2004 = vmatprep.subr.mxu0 0.0
        %2005 = vmatpush1.msra.mxu0 %v1860
        %2006 = vmatprep.subr.mxu0 0.0
        %2007 = vmatpush1.msra.mxu0 %v1861
        %2008 = vmatprep.subr.mxu0 0.0
        %2009 = vmatpush1.msra.mxu0 %v1862
        %2010 = vmatprep.subr.mxu0 0.0
        %2011 = vmatpush1.msra.mxu0 %v1863
        %2012 = vmatprep.subr.mxu0 0.0
        %2013 = vmatpush1.msra.mxu0 %v1864
        %2014 = vmatprep.subr.mxu0 0.0
        %2015 = vmatpush1.msra.mxu0 %v1865
        %2016 = vmatprep.subr.mxu0 0.0
        %2017 = vmatpush1.msra.mxu0 %v1866
        %2018 = vmatprep.subr.mxu0 0.0
        %2019 = vmatpush1.msra.mxu0 %v1867
        %2020 = vmatprep.subr.mxu0 0.0
        %2021 = vmatpush1.msra.mxu0 %v1868
        %2022 = vmatprep.subr.mxu0 0.0
        %2023 = vmatpush1.msra.mxu0 %v1869
        %2024 = vmatprep.subr.mxu0 0.0
        %2025 = vmatpush1.msra.mxu0 %v1870
        %2026 = vmatprep.subr.mxu0 0.0
        %2027 = vmatpush1.msra.mxu0 %v1871
        %2028 = vmatprep.subr.mxu0 0.0
        %2029 = vmatpush1.msra.mxu0 %v1872
        %2030 = vmatprep.subr.mxu0 0.0
        %2031 = vmatpush1.msra.mxu0 %v1873
        %2032 = vmatprep.subr.mxu0 0.0
        %2033 = vmatpush1.msra.mxu0 %v1874
        %2034 = vmatprep.subr.mxu0 0.0
        %2035 = vmatpush1.msra.mxu0 %v1875
        %2036 = vmatprep.subr.mxu0 0.0
        %2037 = vmatpush1.msra.mxu0 %v1876
        %2038 = vmatprep.subr.mxu0 0.0
        %2039 = vmatpush1.msra.mxu0 %v1877
        %2040 = vmatprep.subr.mxu0 0.0
        %2041 = vmatpush1.msra.mxu0 %v1878
        %2042 = vmatprep.subr.mxu0 0.0
        %2043 = vmatpush1.msra.mxu0 %v1879
        %2044 = vmatprep.subr.mxu0 0.0
        %2045 = vmatpush1.msra.mxu0 %v1880
        %2046 = vmatprep.subr.mxu0 0.0
        %2047 = vmatpush1.msra.mxu0 %v1881
        %2048 = vmatprep.subr.mxu0 0.0
        %2049 = vmatpush1.msra.mxu0 %v1882
        %2050 = vmatprep.mubr.f32.mxu0 %v1724
        %2051 = vmatmul.mubr.f32.gmra.mrb[0].mxu0 %v1723
        %v2052 = vpop.f32.mrb[0].mxu0
        %v2053 = vadd.f32 %v1984, %v2052
        %v2054 = vpop.f32.mrb[0].mxu0
        %2055 = vmatprep.mubr.f32.mxu0 %v1732
        %2056 = vmatmul.mubr.f32.gmra.mrb[0].mxu0 %v1731
        %v2057 = vpop.f32.mrb[0].mxu0
        %v2058 = vadd.f32 %v1984, %v2057
        %v2059 = vpop.f32.mrb[0].mxu0
        %2060 = vmatprep.mubr.f32.mxu0 %v1740
        %2061 = vmatmul.mubr.f32.gmra.mrb[0].mxu0 %v1739
        %v2062 = vpop.f32.mrb[0].mxu0
        %v2063 = vadd.f32 %v1984, %v2062
        %v2064 = vpop.f32.mrb[0].mxu0
        %2065 = vmatprep.mubr.f32.mxu0 %v1748
        %2066 = vmatmul.mubr.f32.gmra.mrb[0].mxu0 %v1747
        %v2067 = vpop.f32.mrb[0].mxu0
        %v2068 = vadd.f32 %v1984, %v2067
        %v2069 = vpop.f32.mrb[0].mxu0
        %2070 = vmatprep.mubr.f32.mxu0 %v1756
        %2071 = vmatmul.mubr.f32.gmra.mrb[0].mxu0 %v1755
        %v2072 = vpop.f32.mrb[0].mxu0
        %v2073 = vadd.f32 %v1984, %v2072
        %v2074 = vpop.f32.mrb[0].mxu0
        %2075 = vmatprep.mubr.f32.mxu0 %v1764
        %2076 = vmatmul.mubr.f32.gmra.mrb[0].mxu0 %v1763
        %v2077 = vpop.f32.mrb[0].mxu0
        %v2078 = vadd.f32 %v1984, %v2077
        %v2079 = vpop.f32.mrb[0].mxu0
        %2080 = vmatprep.mubr.f32.mxu0 %v1772
        %2081 = vmatmul.mubr.f32.gmra.mrb[0].mxu0 %v1771
        %v2082 = vpop.f32.mrb[0].mxu0
        %v2083 = vadd.f32 %v1984, %v2082
        %v2084 = vpop.f32.mrb[0].mxu0
        %2085 = vmatprep.mubr.f32.mxu0 %v1780
        %2086 = vmatmul.mubr.f32.gmra.mrb[0].mxu0 %v1779
        %v2087 = vpop.f32.mrb[0].mxu0
        %v2088 = vadd.f32 %v1984, %v2087
        %v2089 = vpop.f32.mrb[0].mxu0
        %2090 = vmatprep.mubr.f32.mxu0 %v1788
        %2091 = vmatmul.mubr.f32.gmra.mrb[0].mxu0 %v1787
        %v2092 = vpop.f32.mrb[0].mxu0
        %v2093 = vadd.f32 %v1984, %v2092
        %v2094 = vpop.f32.mrb[0].mxu0
        %2095 = vmatprep.mubr.f32.mxu0 %v1796
        %2096 = vmatmul.mubr.f32.gmra.mrb[0].mxu0 %v1795
        %v2097 = vpop.f32.mrb[0].mxu0
        %v2098 = vadd.f32 %v1984, %v2097
        %v2099 = vpop.f32.mrb[0].mxu0
        %2100 = vmatprep.mubr.f32.mxu0 %v1804
        %2101 = vmatmul.mubr.f32.gmra.mrb[0].mxu0 %v1803
        %v2102 = vpop.f32.mrb[0].mxu0
        %v2103 = vadd.f32 %v1984, %v2102
        %v2104 = vpop.f32.mrb[0].mxu0
        %2105 = vmatprep.mubr.f32.mxu0 %v1812
        %2106 = vmatmul.mubr.f32.gmra.mrb[0].mxu0 %v1811
        %v2107 = vpop.f32.mrb[0].mxu0
        %v2108 = vadd.f32 %v1984, %v2107
        %v2109 = vpop.f32.mrb[0].mxu0
        %2110 = vmatprep.mubr.f32.mxu0 %v1820
        %2111 = vmatmul.mubr.f32.gmra.mrb[0].mxu0 %v1819
        %v2112 = vpop.f32.mrb[0].mxu0
        %v2113 = vadd.f32 %v1984, %v2112
        %v2114 = vpop.f32.mrb[0].mxu0
        %2115 = vmatprep.mubr.f32.mxu0 %v1828
        %2116 = vmatmul.mubr.f32.gmra.mrb[0].mxu0 %v1827
        %v2117 = vpop.f32.mrb[0].mxu0
        %v2118 = vadd.f32 %v1984, %v2117
        %v2119 = vpop.f32.mrb[0].mxu0
        %2120 = vmatprep.mubr.f32.mxu0 %v1836
        %2121 = vmatmul.mubr.f32.gmra.mrb[0].mxu0 %v1835
        %v2122 = vpop.f32.mrb[0].mxu0
        %v2123 = vadd.f32 %v1984, %v2122
        %v2124 = vpop.f32.mrb[0].mxu0
        %2125 = vmatprep.mubr.f32.mxu0 %v1844
        %2126 = vmatmul.mubr.f32.gmra.mrb[0].mxu0 %v1843
        %v2127 = vpop.f32.mrb[0].mxu0
        %v2128 = vadd.f32 %v1984, %v2127
        %v2129 = vpop.f32.mrb[0].mxu0
        %2130 = vdwg.mxu0
        %2131 = vmatprep.subr.mxu0 0.0
        %2132 = vmatpush1.msra.mxu0 %v1883
        %2133 = vmatprep.subr.mxu0 0.0
        %2134 = vmatpush1.msra.mxu0 %v1884
        %2135 = vmatprep.subr.mxu0 0.0
        %2136 = vmatpush1.msra.mxu0 %v1885
        %2137 = vmatprep.subr.mxu0 0.0
        %2138 = vmatpush1.msra.mxu0 %v1886
        %2139 = vmatprep.subr.mxu0 0.0
        %2140 = vmatpush1.msra.mxu0 %v1887
        %2141 = vmatprep.subr.mxu0 0.0
        %2142 = vmatpush1.msra.mxu0 %v1888
        %2143 = vmatprep.subr.mxu0 0.0
        %2144 = vmatpush1.msra.mxu0 %v1889
        %2145 = vmatprep.subr.mxu0 0.0
        %2146 = vmatpush1.msra.mxu0 %v1890
        %2147 = vmatprep.subr.mxu0 0.0
        %2148 = vmatpush1.msra.mxu0 %v1891
        %2149 = vmatprep.subr.mxu0 0.0
        %2150 = vmatpush1.msra.mxu0 %v1892
        %2151 = vmatprep.subr.mxu0 0.0
        %2152 = vmatpush1.msra.mxu0 %v1893
        %2153 = vmatprep.subr.mxu0 0.0
        %2154 = vmatpush1.msra.mxu0 %v1894
        %2155 = vmatprep.subr.mxu0 0.0
        %2156 = vmatpush1.msra.mxu0 %v1895
        %2157 = vmatprep.subr.mxu0 0.0
        %2158 = vmatpush1.msra.mxu0 %v1896
        %2159 = vmatprep.subr.mxu0 0.0
        %2160 = vmatpush1.msra.mxu0 %v1897
        %2161 = vmatprep.subr.mxu0 0.0
        %2162 = vmatpush1.msra.mxu0 %v1898
        %2163 = vmatprep.subr.mxu0 0.0
        %2164 = vmatpush1.msra.mxu0 %v1899
        %2165 = vmatprep.subr.mxu0 0.0
        %2166 = vmatpush1.msra.mxu0 %v1900
        %2167 = vmatprep.subr.mxu0 0.0
        %2168 = vmatpush1.msra.mxu0 %v1901
        %2169 = vmatprep.subr.mxu0 0.0
        %2170 = vmatpush1.msra.mxu0 %v1902
        %2171 = vmatprep.subr.mxu0 0.0
        %2172 = vmatpush1.msra.mxu0 %v1903
        %2173 = vmatprep.subr.mxu0 0.0
        %2174 = vmatpush1.msra.mxu0 %v1904
        %2175 = vmatprep.subr.mxu0 0.0
        %2176 = vmatpush1.msra.mxu0 %v1905
        %2177 = vmatprep.subr.mxu0 0.0
        %2178 = vmatpush1.msra.mxu0 %v1906
        %2179 = vmatprep.subr.mxu0 0.0
        %2180 = vmatpush1.msra.mxu0 %v1907
        %2181 = vmatprep.subr.mxu0 0.0
        %2182 = vmatpush1.msra.mxu0 %v1908
        %2183 = vmatprep.subr.mxu0 0.0
        %2184 = vmatpush1.msra.mxu0 %v1909
        %2185 = vmatprep.subr.mxu0 0.0
        %2186 = vmatpush1.msra.mxu0 %v1910
        %2187 = vmatprep.subr.mxu0 0.0
        %2188 = vmatpush1.msra.mxu0 %v1911
        %2189 = vmatprep.subr.mxu0 0.0
        %2190 = vmatpush1.msra.mxu0 %v1912
        %2191 = vmatprep.subr.mxu0 0.0
        %2192 = vmatpush1.msra.mxu0 %v1913
        %2193 = vmatprep.subr.mxu0 0.0
        %2194 = vmatpush1.msra.mxu0 %v1914
        %2195 = vmatprep.mubr.f32.mxu0 %v1726
        %2196 = vmatmul.mubr.f32.gmra.mrb[0].mxu0 %v1725
        %v2197 = vpop.f32.mrb[0].mxu0
        %v2198 = vadd.f32 %v2053, %v2197
        %v2199 = vpop.f32.mrb[0].mxu0
        %2200 = vmatprep.mubr.f32.mxu0 %v1734
        %2201 = vmatmul.mubr.f32.gmra.mrb[0].mxu0 %v1733
        %v2202 = vpop.f32.mrb[0].mxu0
        %v2203 = vadd.f32 %v2058, %v2202
        %v2204 = vpop.f32.mrb[0].mxu0
        %2205 = vmatprep.mubr.f32.mxu0 %v1742
        %2206 = vmatmul.mubr.f32.gmra.mrb[0].mxu0 %v1741
        %v2207 = vpop.f32.mrb[0].mxu0
        %v2208 = vadd.f32 %v2063, %v2207
        %v2209 = vpop.f32.mrb[0].mxu0
        %2210 = vmatprep.mubr.f32.mxu0 %v1750
        %2211 = vmatmul.mubr.f32.gmra.mrb[0].mxu0 %v1749
        %v2212 = vpop.f32.mrb[0].mxu0
        %v2213 = vadd.f32 %v2068, %v2212
        %v2214 = vpop.f32.mrb[0].mxu0
        %2215 = vmatprep.mubr.f32.mxu0 %v1758
        %2216 = vmatmul.mubr.f32.gmra.mrb[0].mxu0 %v1757
        %v2217 = vpop.f32.mrb[0].mxu0
        %v2218 = vadd.f32 %v2073, %v2217
        %v2219 = vpop.f32.mrb[0].mxu0
        %2220 = vmatprep.mubr.f32.mxu0 %v1766
        %2221 = vmatmul.mubr.f32.gmra.mrb[0].mxu0 %v1765
        %v2222 = vpop.f32.mrb[0].mxu0
        %v2223 = vadd.f32 %v2078, %v2222
        %v2224 = vpop.f32.mrb[0].mxu0
        %2225 = vmatprep.mubr.f32.mxu0 %v1774
        %2226 = vmatmul.mubr.f32.gmra.mrb[0].mxu0 %v1773
        %v2227 = vpop.f32.mrb[0].mxu0
        %v2228 = vadd.f32 %v2083, %v2227
        %v2229 = vpop.f32.mrb[0].mxu0
        %2230 = vmatprep.mubr.f32.mxu0 %v1782
        %2231 = vmatmul.mubr.f32.gmra.mrb[0].mxu0 %v1781
        %v2232 = vpop.f32.mrb[0].mxu0
        %v2233 = vadd.f32 %v2088, %v2232
        %v2234 = vpop.f32.mrb[0].mxu0
        %2235 = vmatprep.mubr.f32.mxu0 %v1790
        %2236 = vmatmul.mubr.f32.gmra.mrb[0].mxu0 %v1789
        %v2237 = vpop.f32.mrb[0].mxu0
        %v2238 = vadd.f32 %v2093, %v2237
        %v2239 = vpop.f32.mrb[0].mxu0
        %2240 = vmatprep.mubr.f32.mxu0 %v1798
        %2241 = vmatmul.mubr.f32.gmra.mrb[0].mxu0 %v1797
        %v2242 = vpop.f32.mrb[0].mxu0
        %v2243 = vadd.f32 %v2098, %v2242
        %v2244 = vpop.f32.mrb[0].mxu0
        %2245 = vmatprep.mubr.f32.mxu0 %v1806
        %2246 = vmatmul.mubr.f32.gmra.mrb[0].mxu0 %v1805
        %v2247 = vpop.f32.mrb[0].mxu0
        %v2248 = vadd.f32 %v2103, %v2247
        %v2249 = vpop.f32.mrb[0].mxu0
        %2250 = vmatprep.mubr.f32.mxu0 %v1814
        %2251 = vmatmul.mubr.f32.gmra.mrb[0].mxu0 %v1813
        %v2252 = vpop.f32.mrb[0].mxu0
        %v2253 = vadd.f32 %v2108, %v2252
        %v2254 = vpop.f32.mrb[0].mxu0
        %2255 = vmatprep.mubr.f32.mxu0 %v1822
        %2256 = vmatmul.mubr.f32.gmra.mrb[0].mxu0 %v1821
        %v2257 = vpop.f32.mrb[0].mxu0
        %v2258 = vadd.f32 %v2113, %v2257
        %v2259 = vpop.f32.mrb[0].mxu0
        %2260 = vmatprep.mubr.f32.mxu0 %v1830
        %2261 = vmatmul.mubr.f32.gmra.mrb[0].mxu0 %v1829
        %v2262 = vpop.f32.mrb[0].mxu0
        %v2263 = vadd.f32 %v2118, %v2262
        %v2264 = vpop.f32.mrb[0].mxu0
        %2265 = vmatprep.mubr.f32.mxu0 %v1838
        %2266 = vmatmul.mubr.f32.gmra.mrb[0].mxu0 %v1837
        %v2267 = vpop.f32.mrb[0].mxu0
        %v2268 = vadd.f32 %v2123, %v2267
        %v2269 = vpop.f32.mrb[0].mxu0
        %2270 = vmatprep.mubr.f32.mxu0 %v1846
        %2271 = vmatmul.mubr.f32.gmra.mrb[0].mxu0 %v1845
        %v2272 = vpop.f32.mrb[0].mxu0
        %v2273 = vadd.f32 %v2128, %v2272
        %v2274 = vpop.f32.mrb[0].mxu0
        %2275 = vdwg.mxu0
        %2276 = vmatprep.subr.mxu0 0.0
        %2277 = vmatpush1.msra.mxu0 %v1915
        %2278 = vmatprep.subr.mxu0 0.0
        %2279 = vmatpush1.msra.mxu0 %v1916
        %2280 = vmatprep.subr.mxu0 0.0
        %2281 = vmatpush1.msra.mxu0 %v1917
        %2282 = vmatprep.subr.mxu0 0.0
        %2283 = vmatpush1.msra.mxu0 %v1918
        %2284 = vmatprep.subr.mxu0 0.0
        %2285 = vmatpush1.msra.mxu0 %v1919
        %2286 = vmatprep.subr.mxu0 0.0
        %2287 = vmatpush1.msra.mxu0 %v1920
        %2288 = vmatprep.subr.mxu0 0.0
        %2289 = vmatpush1.msra.mxu0 %v1921
        %2290 = vmatprep.subr.mxu0 0.0
        %2291 = vmatpush1.msra.mxu0 %v1922
        %2292 = vmatprep.subr.mxu0 0.0
        %2293 = vmatpush1.msra.mxu0 %v1923
        %2294 = vmatprep.subr.mxu0 0.0
        %2295 = vmatpush1.msra.mxu0 %v1924
        %2296 = vmatprep.subr.mxu0 0.0
        %2297 = vmatpush1.msra.mxu0 %v1925
        %2298 = vmatprep.subr.mxu0 0.0
        %2299 = vmatpush1.msra.mxu0 %v1926
        %2300 = vmatprep.subr.mxu0 0.0
        %2301 = vmatpush1.msra.mxu0 %v1927
        %2302 = vmatprep.subr.mxu0 0.0
        %2303 = vmatpush1.msra.mxu0 %v1928
        %2304 = vmatprep.subr.mxu0 0.0
        %2305 = vmatpush1.msra.mxu0 %v1929
        %2306 = vmatprep.subr.mxu0 0.0
        %2307 = vmatpush1.msra.mxu0 %v1930
        %2308 = vmatprep.subr.mxu0 0.0
        %2309 = vmatpush1.msra.mxu0 %v1931
        %2310 = vmatprep.subr.mxu0 0.0
        %2311 = vmatpush1.msra.mxu0 %v1932
        %2312 = vmatprep.subr.mxu0 0.0
        %2313 = vmatpush1.msra.mxu0 %v1933
        %2314 = vmatprep.subr.mxu0 0.0
        %2315 = vmatpush1.msra.mxu0 %v1934
        %2316 = vmatprep.subr.mxu0 0.0
        %2317 = vmatpush1.msra.mxu0 %v1935
        %2318 = vmatprep.subr.mxu0 0.0
        %2319 = vmatpush1.msra.mxu0 %v1936
        %2320 = vmatprep.subr.mxu0 0.0
        %2321 = vmatpush1.msra.mxu0 %v1937
        %2322 = vmatprep.subr.mxu0 0.0
        %2323 = vmatpush1.msra.mxu0 %v1938
        %2324 = vmatprep.subr.mxu0 0.0
        %2325 = vmatpush1.msra.mxu0 %v1939
        %2326 = vmatprep.subr.mxu0 0.0
        %2327 = vmatpush1.msra.mxu0 %v1940
        %2328 = vmatprep.subr.mxu0 0.0
        %2329 = vmatpush1.msra.mxu0 %v1941
        %2330 = vmatprep.subr.mxu0 0.0
        %2331 = vmatpush1.msra.mxu0 %v1942
        %2332 = vmatprep.subr.mxu0 0.0
        %2333 = vmatpush1.msra.mxu0 %v1943
        %2334 = vmatprep.subr.mxu0 0.0
        %2335 = vmatpush1.msra.mxu0 %v1944
        %2336 = vmatprep.subr.mxu0 0.0
        %2337 = vmatpush1.msra.mxu0 %v1945
        %2338 = vmatprep.subr.mxu0 0.0
        %2339 = vmatpush1.msra.mxu0 %v1946
        %2340 = vmatprep.mubr.f32.mxu0 %v1728
        %2341 = vmatmul.mubr.f32.gmra.mrb[0].mxu0 %v1727
        %v2342 = vpop.f32.mrb[0].mxu0
        %v2343 = vadd.f32 %v2198, %v2342
        %v2344 = vpop.f32.mrb[0].mxu0
        %2345 = vmatprep.mubr.f32.mxu0 %v1736
        %2346 = vmatmul.mubr.f32.gmra.mrb[0].mxu0 %v1735
        %v2347 = vpop.f32.mrb[0].mxu0
        %v2348 = vadd.f32 %v2203, %v2347
        %v2349 = vpop.f32.mrb[0].mxu0
        %2350 = vmatprep.mubr.f32.mxu0 %v1744
        %2351 = vmatmul.mubr.f32.gmra.mrb[0].mxu0 %v1743
        %v2352 = vpop.f32.mrb[0].mxu0
        %v2353 = vadd.f32 %v2208, %v2352
        %v2354 = vpop.f32.mrb[0].mxu0
        %2355 = vmatprep.mubr.f32.mxu0 %v1752
        %2356 = vmatmul.mubr.f32.gmra.mrb[0].mxu0 %v1751
        %v2357 = vpop.f32.mrb[0].mxu0
        %v2358 = vadd.f32 %v2213, %v2357
        %v2359 = vpop.f32.mrb[0].mxu0
        %2360 = vmatprep.mubr.f32.mxu0 %v1760
        %2361 = vmatmul.mubr.f32.gmra.mrb[0].mxu0 %v1759
        %v2362 = vpop.f32.mrb[0].mxu0
        %v2363 = vadd.f32 %v2218, %v2362
        %v2364 = vpop.f32.mrb[0].mxu0
        %2365 = vmatprep.mubr.f32.mxu0 %v1768
        %2366 = vmatmul.mubr.f32.gmra.mrb[0].mxu0 %v1767
        %v2367 = vpop.f32.mrb[0].mxu0
        %v2368 = vadd.f32 %v2223, %v2367
        %v2369 = vpop.f32.mrb[0].mxu0
        %2370 = vmatprep.mubr.f32.mxu0 %v1776
        %2371 = vmatmul.mubr.f32.gmra.mrb[0].mxu0 %v1775
        %v2372 = vpop.f32.mrb[0].mxu0
        %v2373 = vadd.f32 %v2228, %v2372
        %v2374 = vpop.f32.mrb[0].mxu0
        %2375 = vmatprep.mubr.f32.mxu0 %v1784
        %2376 = vmatmul.mubr.f32.gmra.mrb[0].mxu0 %v1783
        %v2377 = vpop.f32.mrb[0].mxu0
        %v2378 = vadd.f32 %v2233, %v2377
        %v2379 = vpop.f32.mrb[0].mxu0
        %2380 = vmatprep.mubr.f32.mxu0 %v1792
        %2381 = vmatmul.mubr.f32.gmra.mrb[0].mxu0 %v1791
        %v2382 = vpop.f32.mrb[0].mxu0
        %v2383 = vadd.f32 %v2238, %v2382
        %v2384 = vpop.f32.mrb[0].mxu0
        %2385 = vmatprep.mubr.f32.mxu0 %v1800
        %2386 = vmatmul.mubr.f32.gmra.mrb[0].mxu0 %v1799
        %v2387 = vpop.f32.mrb[0].mxu0
        %v2388 = vadd.f32 %v2243, %v2387
        %v2389 = vpop.f32.mrb[0].mxu0
        %2390 = vmatprep.mubr.f32.mxu0 %v1808
        %2391 = vmatmul.mubr.f32.gmra.mrb[0].mxu0 %v1807
        %v2392 = vpop.f32.mrb[0].mxu0
        %v2393 = vadd.f32 %v2248, %v2392
        %v2394 = vpop.f32.mrb[0].mxu0
        %2395 = vmatprep.mubr.f32.mxu0 %v1816
        %2396 = vmatmul.mubr.f32.gmra.mrb[0].mxu0 %v1815
        %v2397 = vpop.f32.mrb[0].mxu0
        %v2398 = vadd.f32 %v2253, %v2397
        %v2399 = vpop.f32.mrb[0].mxu0
        %2400 = vmatprep.mubr.f32.mxu0 %v1824
        %2401 = vmatmul.mubr.f32.gmra.mrb[0].mxu0 %v1823
        %v2402 = vpop.f32.mrb[0].mxu0
        %v2403 = vadd.f32 %v2258, %v2402
        %v2404 = vpop.f32.mrb[0].mxu0
        %2405 = vmatprep.mubr.f32.mxu0 %v1832
        %2406 = vmatmul.mubr.f32.gmra.mrb[0].mxu0 %v1831
        %v2407 = vpop.f32.mrb[0].mxu0
        %v2408 = vadd.f32 %v2263, %v2407
        %v2409 = vpop.f32.mrb[0].mxu0
        %2410 = vmatprep.mubr.f32.mxu0 %v1840
        %2411 = vmatmul.mubr.f32.gmra.mrb[0].mxu0 %v1839
        %v2412 = vpop.f32.mrb[0].mxu0
        %v2413 = vadd.f32 %v2268, %v2412
        %v2414 = vpop.f32.mrb[0].mxu0
        %2415 = vmatprep.mubr.f32.mxu0 %v1848
        %2416 = vmatmul.mubr.f32.gmra.mrb[0].mxu0 %v1847
        %v2417 = vpop.f32.mrb[0].mxu0
        %v2418 = vadd.f32 %v2273, %v2417
        %v2419 = vpop.f32.mrb[0].mxu0
        %2420 = vdwg.mxu0
        %2421 = vmatprep.subr.mxu0 0.0
        %2422 = vmatpush1.msra.mxu0 %v1947
        %2423 = vmatprep.subr.mxu0 0.0
        %2424 = vmatpush1.msra.mxu0 %v1948
        %2425 = vmatprep.subr.mxu0 0.0
        %2426 = vmatpush1.msra.mxu0 %v1949
        %2427 = vmatprep.subr.mxu0 0.0
        %2428 = vmatpush1.msra.mxu0 %v1950
        %2429 = vmatprep.subr.mxu0 0.0
        %2430 = vmatpush1.msra.mxu0 %v1951
        %2431 = vmatprep.subr.mxu0 0.0
        %2432 = vmatpush1.msra.mxu0 %v1952
        %2433 = vmatprep.subr.mxu0 0.0
        %2434 = vmatpush1.msra.mxu0 %v1953
        %2435 = vmatprep.subr.mxu0 0.0
        %2436 = vmatpush1.msra.mxu0 %v1954
        %2437 = vmatprep.subr.mxu0 0.0
        %2438 = vmatpush1.msra.mxu0 %v1955
        %2439 = vmatprep.subr.mxu0 0.0
        %2440 = vmatpush1.msra.mxu0 %v1956
        %2441 = vmatprep.subr.mxu0 0.0
        %2442 = vmatpush1.msra.mxu0 %v1957
        %2443 = vmatprep.subr.mxu0 0.0
        %2444 = vmatpush1.msra.mxu0 %v1958
        %2445 = vmatprep.subr.mxu0 0.0
        %2446 = vmatpush1.msra.mxu0 %v1959
        %2447 = vmatprep.subr.mxu0 0.0
        %2448 = vmatpush1.msra.mxu0 %v1960
        %2449 = vmatprep.subr.mxu0 0.0
        %2450 = vmatpush1.msra.mxu0 %v1961
        %2451 = vmatprep.subr.mxu0 0.0
        %2452 = vmatpush1.msra.mxu0 %v1962
        %2453 = vmatprep.subr.mxu0 0.0
        %2454 = vmatpush1.msra.mxu0 %v1963
        %2455 = vmatprep.subr.mxu0 0.0
        %2456 = vmatpush1.msra.mxu0 %v1964
        %2457 = vmatprep.subr.mxu0 0.0
        %2458 = vmatpush1.msra.mxu0 %v1965
        %2459 = vmatprep.subr.mxu0 0.0
        %2460 = vmatpush1.msra.mxu0 %v1966
        %2461 = vmatprep.subr.mxu0 0.0
        %2462 = vmatpush1.msra.mxu0 %v1967
        %2463 = vmatprep.subr.mxu0 0.0
        %2464 = vmatpush1.msra.mxu0 %v1968
        %2465 = vmatprep.subr.mxu0 0.0
        %2466 = vmatpush1.msra.mxu0 %v1969
        %2467 = vmatprep.subr.mxu0 0.0
        %2468 = vmatpush1.msra.mxu0 %v1970
        %2469 = vmatprep.subr.mxu0 0.0
        %2470 = vmatpush1.msra.mxu0 %v1971
        %2471 = vmatprep.subr.mxu0 0.0
        %2472 = vmatpush1.msra.mxu0 %v1972
        %2473 = vmatprep.subr.mxu0 0.0
        %2474 = vmatpush1.msra.mxu0 %v1973
        %2475 = vmatprep.subr.mxu0 0.0
        %2476 = vmatpush1.msra.mxu0 %v1974
        %2477 = vmatprep.subr.mxu0 0.0
        %2478 = vmatpush1.msra.mxu0 %v1975
        %2479 = vmatprep.subr.mxu0 0.0
        %2480 = vmatpush1.msra.mxu0 %v1976
        %2481 = vmatprep.subr.mxu0 0.0
        %2482 = vmatpush1.msra.mxu0 %v1977
        %2483 = vmatprep.subr.mxu0 0.0
        %2484 = vmatpush1.msra.mxu0 %v1978
        %2485 = vmatprep.mubr.f32.mxu0 %v1730
        %2486 = vmatmul.mubr.f32.gmra.mrb[0].mxu0 %v1729
        %v2487 = vpop.f32.mrb[0].mxu0
        %v2488 = vadd.f32 %v2343, %v2487
        %v2489 = vpop.f32.mrb[0].mxu0
        %2490 = vmatprep.mubr.f32.mxu0 %v1738
        %2491 = vmatmul.mubr.f32.gmra.mrb[0].mxu0 %v1737
        %v2492 = vpop.f32.mrb[0].mxu0
        %v2493 = vadd.f32 %v2348, %v2492
        %v2494 = vpop.f32.mrb[0].mxu0
        %2495 = vmatprep.mubr.f32.mxu0 %v1746
        %2496 = vmatmul.mubr.f32.gmra.mrb[0].mxu0 %v1745
        %v2497 = vpop.f32.mrb[0].mxu0
        %v2498 = vadd.f32 %v2353, %v2497
        %v2499 = vpop.f32.mrb[0].mxu0
        %2500 = vmatprep.mubr.f32.mxu0 %v1754
        %2501 = vmatmul.mubr.f32.gmra.mrb[0].mxu0 %v1753
        %v2502 = vpop.f32.mrb[0].mxu0
        %v2503 = vadd.f32 %v2358, %v2502
        %v2504 = vpop.f32.mrb[0].mxu0
        %2505 = vmatprep.mubr.f32.mxu0 %v1762
        %2506 = vmatmul.mubr.f32.gmra.mrb[0].mxu0 %v1761
        %v2507 = vpop.f32.mrb[0].mxu0
        %v2508 = vadd.f32 %v2363, %v2507
        %v2509 = vpop.f32.mrb[0].mxu0
        %2510 = vmatprep.mubr.f32.mxu0 %v1770
        %2511 = vmatmul.mubr.f32.gmra.mrb[0].mxu0 %v1769
        %v2512 = vpop.f32.mrb[0].mxu0
        %v2513 = vadd.f32 %v2368, %v2512
        %v2514 = vpop.f32.mrb[0].mxu0
        %2515 = vmatprep.mubr.f32.mxu0 %v1778
        %2516 = vmatmul.mubr.f32.gmra.mrb[0].mxu0 %v1777
        %v2517 = vpop.f32.mrb[0].mxu0
        %v2518 = vadd.f32 %v2373, %v2517
        %v2519 = vpop.f32.mrb[0].mxu0
        %2520 = vmatprep.mubr.f32.mxu0 %v1786
        %2521 = vmatmul.mubr.f32.gmra.mrb[0].mxu0 %v1785
        %v2522 = vpop.f32.mrb[0].mxu0
        %v2523 = vadd.f32 %v2378, %v2522
        %v2524 = vpop.f32.mrb[0].mxu0
        %2525 = vmatprep.mubr.f32.mxu0 %v1794
        %2526 = vmatmul.mubr.f32.gmra.mrb[0].mxu0 %v1793
        %v2527 = vpop.f32.mrb[0].mxu0
        %v2528 = vadd.f32 %v2383, %v2527
        %v2529 = vpop.f32.mrb[0].mxu0
        %2530 = vmatprep.mubr.f32.mxu0 %v1802
        %2531 = vmatmul.mubr.f32.gmra.mrb[0].mxu0 %v1801
        %v2532 = vpop.f32.mrb[0].mxu0
        %v2533 = vadd.f32 %v2388, %v2532
        %v2534 = vpop.f32.mrb[0].mxu0
        %2535 = vmatprep.mubr.f32.mxu0 %v1810
        %2536 = vmatmul.mubr.f32.gmra.mrb[0].mxu0 %v1809
        %v2537 = vpop.f32.mrb[0].mxu0
        %v2538 = vadd.f32 %v2393, %v2537
        %v2539 = vpop.f32.mrb[0].mxu0
        %2540 = vmatprep.mubr.f32.mxu0 %v1818
        %2541 = vmatmul.mubr.f32.gmra.mrb[0].mxu0 %v1817
        %v2542 = vpop.f32.mrb[0].mxu0
        %v2543 = vadd.f32 %v2398, %v2542
        %v2544 = vpop.f32.mrb[0].mxu0
        %2545 = vmatprep.mubr.f32.mxu0 %v1826
        %2546 = vmatmul.mubr.f32.gmra.mrb[0].mxu0 %v1825
        %v2547 = vpop.f32.mrb[0].mxu0
        %v2548 = vadd.f32 %v2403, %v2547
        %v2549 = vpop.f32.mrb[0].mxu0
        %2550 = vmatprep.mubr.f32.mxu0 %v1834
        %2551 = vmatmul.mubr.f32.gmra.mrb[0].mxu0 %v1833
        %v2552 = vpop.f32.mrb[0].mxu0
        %v2553 = vadd.f32 %v2408, %v2552
        %v2554 = vpop.f32.mrb[0].mxu0
        %2555 = vmatprep.mubr.f32.mxu0 %v1842
        %2556 = vmatmul.mubr.f32.gmra.mrb[0].mxu0 %v1841
        %v2557 = vpop.f32.mrb[0].mxu0
        %v2558 = vadd.f32 %v2413, %v2557
        %v2559 = vpop.f32.mrb[0].mxu0
        %2560 = vmatprep.mubr.f32.mxu0 %v1850
        %2561 = vmatmul.mubr.f32.gmra.mrb[0].mxu0 %v1849
        %v2562 = vpop.f32.mrb[0].mxu0
        %v2563 = vadd.f32 %v2418, %v2562
        %v2564 = vpop.f32.mrb[0].mxu0
        %2565 = vdwg.mxu0
        %v2566 = vlaneseq
        %v2567 = vand.u32 %v2566, 127
        %vm2568 = vcmp.lt.s32.totalorder %v2567, 10
        %v2569 = vsel %vm2568, %v2488, -inf
        %v2570 = vsel %vm2568, %v2493, -inf
        %v2571 = vsel %vm2568, %v2498, -inf
        %v2572 = vsel %vm2568, %v2503, -inf
        %v2573 = vsel %vm2568, %v2508, -inf
        %v2574 = vsel %vm2568, %v2513, -inf
        %v2575 = vsel %vm2568, %v2518, -inf
        %v2576 = vsel %vm2568, %v2523, -inf
        %v2577 = vsel %vm2568, %v2528, -inf
        %v2578 = vsel %vm2568, %v2533, -inf
        %v2579 = vsel %vm2568, %v2538, -inf
        %v2580 = vsel %vm2568, %v2543, -inf
        %v2581 = vsel %vm2568, %v2548, -inf
        %v2582 = vsel %vm2568, %v2553, -inf
        %v2583 = vsel %vm2568, %v2558, -inf
        %v2584 = vsel %vm2568, %v2563, -inf
        %2585 = vmax.xlane.f32.xlu0 %v2569
        %v2586 = vpop.xlane.xlu0 %2585
        %2587 = vmax.xlane.f32.xlu0 %v2570
        %v2588 = vpop.xlane.xlu0 %2587
        %2589 = vmax.xlane.f32.xlu0 %v2571
        %v2590 = vpop.xlane.xlu0 %2589
        %2591 = vmax.xlane.f32.xlu0 %v2572
        %v2592 = vpop.xlane.xlu0 %2591
        %2593 = vmax.xlane.f32.xlu0 %v2573
        %v2594 = vpop.xlane.xlu0 %2593
        %2595 = vmax.xlane.f32.xlu0 %v2574
        %v2596 = vpop.xlane.xlu0 %2595
        %2597 = vmax.xlane.f32.xlu0 %v2575
        %v2598 = vpop.xlane.xlu0 %2597
        %2599 = vmax.xlane.f32.xlu0 %v2576
        %v2600 = vpop.xlane.xlu0 %2599
        %2601 = vmax.xlane.f32.xlu0 %v2577
        %v2602 = vpop.xlane.xlu0 %2601
        %2603 = vmax.xlane.f32.xlu0 %v2578
        %v2604 = vpop.xlane.xlu0 %2603
        %2605 = vmax.xlane.f32.xlu0 %v2579
        %v2606 = vpop.xlane.xlu0 %2605
        %2607 = vmax.xlane.f32.xlu0 %v2580
        %v2608 = vpop.xlane.xlu0 %2607
        %2609 = vmax.xlane.f32.xlu0 %v2581
        %v2610 = vpop.xlane.xlu0 %2609
        %2611 = vmax.xlane.f32.xlu0 %v2582
        %v2612 = vpop.xlane.xlu0 %2611
        %2613 = vmax.xlane.f32.xlu0 %v2583
        %v2614 = vpop.xlane.xlu0 %2613
        %2615 = vmax.xlane.f32.xlu0 %v2584
        %v2616 = vpop.xlane.xlu0 %2615
        %v2617 = vsub.f32 %v2569, %v2586
        %v2618 = vsub.f32 %v2570, %v2588
        %v2619 = vsub.f32 %v2571, %v2590
        %v2620 = vsub.f32 %v2572, %v2592
        %v2621 = vsub.f32 %v2573, %v2594
        %v2622 = vsub.f32 %v2574, %v2596
        %v2623 = vsub.f32 %v2575, %v2598
        %v2624 = vsub.f32 %v2576, %v2600
        %v2625 = vsub.f32 %v2577, %v2602
        %v2626 = vsub.f32 %v2578, %v2604
        %v2627 = vsub.f32 %v2579, %v2606
        %v2628 = vsub.f32 %v2580, %v2608
        %v2629 = vsub.f32 %v2581, %v2610
        %v2630 = vsub.f32 %v2582, %v2612
        %v2631 = vsub.f32 %v2583, %v2614
        %v2632 = vsub.f32 %v2584, %v2616
        %v2633 = vmul.f32 %v2617, 1.442695
        %v2634 = vpow.pop %v2633
        %v2635 = vmul.f32 %v2618, 1.442695
        %v2636 = vpow.pop %v2635
        %v2637 = vmul.f32 %v2619, 1.442695
        %v2638 = vpow.pop %v2637
        %v2639 = vmul.f32 %v2620, 1.442695
        %v2640 = vpow.pop %v2639
        %v2641 = vmul.f32 %v2621, 1.442695
        %v2642 = vpow.pop %v2641
        %v2643 = vmul.f32 %v2622, 1.442695
        %v2644 = vpow.pop %v2643
        %v2645 = vmul.f32 %v2623, 1.442695
        %v2646 = vpow.pop %v2645
        %v2647 = vmul.f32 %v2624, 1.442695
        %v2648 = vpow.pop %v2647
        %v2649 = vmul.f32 %v2625, 1.442695
        %v2650 = vpow.pop %v2649
        %v2651 = vmul.f32 %v2626, 1.442695
        %v2652 = vpow.pop %v2651
        %v2653 = vmul.f32 %v2627, 1.442695
        %v2654 = vpow.pop %v2653
        %v2655 = vmul.f32 %v2628, 1.442695
        %v2656 = vpow.pop %v2655
        %v2657 = vmul.f32 %v2629, 1.442695
        %v2658 = vpow.pop %v2657
        %v2659 = vmul.f32 %v2630, 1.442695
        %v2660 = vpow.pop %v2659
        %v2661 = vmul.f32 %v2631, 1.442695
        %v2662 = vpow.pop %v2661
        %v2663 = vmul.f32 %v2632, 1.442695
        %v2664 = vpow.pop %v2663
        %2665 = vadd.xlane.f32.xlu0 %v2634
        %v2666 = vpop.xlane.xlu0 %2665
        %2667 = vadd.xlane.f32.xlu0 %v2636
        %v2668 = vpop.xlane.xlu0 %2667
        %2669 = vadd.xlane.f32.xlu0 %v2638
        %v2670 = vpop.xlane.xlu0 %2669
        %2671 = vadd.xlane.f32.xlu0 %v2640
        %v2672 = vpop.xlane.xlu0 %2671
        %2673 = vadd.xlane.f32.xlu0 %v2642
        %v2674 = vpop.xlane.xlu0 %2673
        %2675 = vadd.xlane.f32.xlu0 %v2644
        %v2676 = vpop.xlane.xlu0 %2675
        %2677 = vadd.xlane.f32.xlu0 %v2646
        %v2678 = vpop.xlane.xlu0 %2677
        %2679 = vadd.xlane.f32.xlu0 %v2648
        %v2680 = vpop.xlane.xlu0 %2679
        %2681 = vadd.xlane.f32.xlu0 %v2650
        %v2682 = vpop.xlane.xlu0 %2681
        %2683 = vadd.xlane.f32.xlu0 %v2652
        %v2684 = vpop.xlane.xlu0 %2683
        %2685 = vadd.xlane.f32.xlu0 %v2654
        %v2686 = vpop.xlane.xlu0 %2685
        %2687 = vadd.xlane.f32.xlu0 %v2656
        %v2688 = vpop.xlane.xlu0 %2687
        %2689 = vadd.xlane.f32.xlu0 %v2658
        %v2690 = vpop.xlane.xlu0 %2689
        %2691 = vadd.xlane.f32.xlu0 %v2660
        %v2692 = vpop.xlane.xlu0 %2691
        %2693 = vadd.xlane.f32.xlu0 %v2662
        %v2694 = vpop.xlane.xlu0 %2693
        %2695 = vadd.xlane.f32.xlu0 %v2664
        %v2696 = vpop.xlane.xlu0 %2695
        %v2697 = vlog2.pop %v2666
        %v2698 = vmul.f32 %v2697, 0.6931472
        %v2699 = vlog2.pop %v2668
        %v2700 = vmul.f32 %v2699, 0.6931472
        %v2701 = vlog2.pop %v2670
        %v2702 = vmul.f32 %v2701, 0.6931472
        %v2703 = vlog2.pop %v2672
        %v2704 = vmul.f32 %v2703, 0.6931472
        %v2705 = vlog2.pop %v2674
        %v2706 = vmul.f32 %v2705, 0.6931472
        %v2707 = vlog2.pop %v2676
        %v2708 = vmul.f32 %v2707, 0.6931472
        %v2709 = vlog2.pop %v2678
        %v2710 = vmul.f32 %v2709, 0.6931472
        %v2711 = vlog2.pop %v2680
        %v2712 = vmul.f32 %v2711, 0.6931472
        %v2713 = vlog2.pop %v2682
        %v2714 = vmul.f32 %v2713, 0.6931472
        %v2715 = vlog2.pop %v2684
        %v2716 = vmul.f32 %v2715, 0.6931472
        %v2717 = vlog2.pop %v2686
        %v2718 = vmul.f32 %v2717, 0.6931472
        %v2719 = vlog2.pop %v2688
        %v2720 = vmul.f32 %v2719, 0.6931472
        %v2721 = vlog2.pop %v2690
        %v2722 = vmul.f32 %v2721, 0.6931472
        %v2723 = vlog2.pop %v2692
        %v2724 = vmul.f32 %v2723, 0.6931472
        %v2725 = vlog2.pop %v2694
        %v2726 = vmul.f32 %v2725, 0.6931472
        %v2727 = vlog2.pop %v2696
        %v2728 = vmul.f32 %v2727, 0.6931472
        %v2729 = vadd.f32 %v2586, %v2698
        %v2730 = vadd.f32 %v2588, %v2700
        %v2731 = vadd.f32 %v2590, %v2702
        %v2732 = vadd.f32 %v2592, %v2704
        %v2733 = vadd.f32 %v2594, %v2706
        %v2734 = vadd.f32 %v2596, %v2708
        %v2735 = vadd.f32 %v2598, %v2710
        %v2736 = vadd.f32 %v2600, %v2712
        %v2737 = vadd.f32 %v2602, %v2714
        %v2738 = vadd.f32 %v2604, %v2716
        %v2739 = vadd.f32 %v2606, %v2718
        %v2740 = vadd.f32 %v2608, %v2720
        %v2741 = vadd.f32 %v2610, %v2722
        %v2742 = vadd.f32 %v2612, %v2724
        %v2743 = vadd.f32 %v2614, %v2726
        %v2744 = vadd.f32 %v2616, %v2728
        %v2745 = vsub.f32 %v2569, %v2729
        %v2746 = vsub.f32 %v2570, %v2730
        %v2747 = vsub.f32 %v2571, %v2731
        %v2748 = vsub.f32 %v2572, %v2732
        %v2749 = vsub.f32 %v2573, %v2733
        %v2750 = vsub.f32 %v2574, %v2734
        %v2751 = vsub.f32 %v2575, %v2735
        %v2752 = vsub.f32 %v2576, %v2736
        %v2753 = vsub.f32 %v2577, %v2737
        %v2754 = vsub.f32 %v2578, %v2738
        %v2755 = vsub.f32 %v2579, %v2739
        %v2756 = vsub.f32 %v2580, %v2740
        %v2757 = vsub.f32 %v2581, %v2741
        %v2758 = vsub.f32 %v2582, %v2742
        %v2759 = vsub.f32 %v2583, %v2743
        %v2760 = vsub.f32 %v2584, %v2744
        %2761 = vst [vmem:[%s287] sm:$0xff] %v2745
        %2762 = vst [vmem:[%s287 + $0x8] sm:$0xff] %v2746
        %2763 = vst [vmem:[%s287 + $0x10] sm:$0xff] %v2747
        %2764 = vst [vmem:[%s287 + $0x18] sm:$0xff] %v2748
        %2765 = vst [vmem:[%s287 + $0x20] sm:$0xff] %v2749
        %2766 = vst [vmem:[%s287 + $0x28] sm:$0xff] %v2750
        %2767 = vst [vmem:[%s287 + $0x30] sm:$0xff] %v2751
        %2768 = vst [vmem:[%s287 + $0x38] sm:$0xff] %v2752
        %2769 = vst [vmem:[%s287 + $0x40] sm:$0xff] %v2753
        %2770 = vst [vmem:[%s287 + $0x48] sm:$0xff] %v2754
        %2771 = vst [vmem:[%s287 + $0x50] sm:$0xff] %v2755
        %2772 = vst [vmem:[%s287 + $0x58] sm:$0xff] %v2756
        %2773 = vst [vmem:[%s287 + $0x60] sm:$0xff] %v2757
        %2774 = vst [vmem:[%s287 + $0x68] sm:$0xff] %v2758
        %2775 = vst [vmem:[%s287 + $0x70] sm:$0xff] %v2759
        %2776 = vst [vmem:[%s287 + $0x78] sm:$0xff] %v2760
        %s2777 = smul.u32 16, %s21
        %p2778 = scmp.lt.s32.totalorder %s2777, 31
        %s2779 = scalar_select %p2778, %s2777, 31
        %s2780 = smul.addr %s2779, 8
        %s2781 = scalar_lea.vmem %s5, %s2780
        // Predicated region
        $region57: #{net_forward.1} parent=39 // pred_check
          %p2782 = pneg %p149
        $region58: #{net_forward.1} parent=39 // pred_check_branch
          %2784 = sbr.rel (%p2782) target = $region60
        $region59: #{net_forward.1} parent=39 // pred_region
          %s2785 = smul.u32 16, %s21
        $region60: #{net_forward.1} parent=39 // pred_fallthru
          _
      $region40: #{net_forward.1} parent=5 // pred_fallthru
        _
      %p2786 = scmp.le.s32.totalorder 2, %s16
      // Predicated region
      $region61: #{net_forward.1} parent=5 // pred_check
        %p2787 = pneg %p2786
      $region62: #{net_forward.1} parent=5 // pred_check_branch
        %2789 = sbr.rel (%p2787) target = $region64
      $region63: #{net_forward.1} parent=5 // pred_region
        %s2790 = ssub.s32 %s16, 2
        // Predicated region
        $region65: #{net_forward.1} parent=63 // pred_check
          %p2791 = pneg %p155
        $region66: #{net_forward.1} parent=63 // pred_check_branch
          %2793 = sbr.rel (%p2791) target = $region68
        $region67: #{net_forward.1} parent=63 // pred_region
          %s2794 = smul.u32 16, %s22
          %p2795 = scmp.lt.s32.totalorder %s2794, 31
          %s2796 = scalar_select %p2795, %s2794, 31
          %s2797 = smul.addr %s2796, 8
          %s2798 = scalar_lea.vmem %s5, %s2797
        $region68: #{net_forward.1} parent=63 // pred_fallthru
          _
      $region64: #{net_forward.1} parent=5 // pred_fallthru
        _
    $region6: #{net_forward.1} parent=1 // loop_footer
      %s20 = sadd.s32 1, %s16
    $region7: #{net_forward.1} parent=1 // loop_footer_branch
      %15 = sbr.rel target = $region3
    $region8: #{net_forward.1} parent=1 // loop_exit
      _
    %2799 = vsyncpa [#allocation3], 1
    %s2800 = scalar_lea.sflag [#allocation3], 1
    %2801 = vsyncpa %s2800, 1
    %2802 = vsyncpa [#allocation5], 1
    %2803 = vsyncpa [#allocation8], 1

</llo_original>
